<compile_context>
chip_gen: v5e
topology: v5e:2x2
jax: 0.10.0
libtpu: 0.0.40
codegen_flags: <defaults>
</compile_context>

<pallas_src>
import numpy as np

import jax
import jax.numpy as jnp
from jax.experimental import pallas as pl
from jax.experimental.pallas import tpu as pltpu

KH = KW = 4            # conv kernel size (all layers)
LRELU_SLOPE = 0.2
LANES = 128


def _leaky_relu(x):
    return jnp.where(x > 0, x, LRELU_SLOPE * x)


# ----------------------------------------------------------------------------
# Fused kernel: conv1(+b,lrelu) -> conv2(+b,lrelu) -> conv3(+b,sigmoid)
# One grid step == one batch sample; intermediates never touch HBM.
# ----------------------------------------------------------------------------
def _dcgan_disc_kernel(p1_ref, w1_ref, b1_ref, selbig_ref, w2t_ref, b2_ref,
                       w3_ref, b3_ref, o_ref):
    # ---- layer 1: im2col patches @ W1 + b1, LeakyReLU ----------------------
    # p1_ref: [1, OH1*OW1, KH*KW*C] bf16     w1_ref: [KH*KW*C, ndf] bf16
    a1 = jnp.dot(p1_ref[0], w1_ref[...], preferred_element_type=jnp.float32)
    a1 = _leaky_relu(a1 + b1_ref[...])                       # [64, ndf] f32
    a1 = a1.astype(jnp.bfloat16)

    # ---- layer 2: stride-2/pad-1 conv via tap-selection matmuls ------------
    # selbig_ref: [KH*KW*OH2*OW2, OH1*OW1] bf16 (0/1).  One MXU dot gathers,
    # for every tap t and output position p, the input row feeding it
    # (all-zero row == zero padding).
    n_taps = w2t_ref.shape[0]                       # KH*KW = 16
    m2 = selbig_ref.shape[0] // n_taps              # OH2*OW2 = 16
    oc2 = w2t_ref.shape[2]                          # 2*ndf
    gath = jnp.dot(selbig_ref[...], a1,
                   preferred_element_type=jnp.float32)        # [n_taps*m2, ndf]

    acc = jnp.zeros((m2, oc2), jnp.float32) + b2_ref[...]     # bias init
    for t in range(n_taps):                                   # unrolled, tiny dots
        g_t = gath[t * m2:(t + 1) * m2, :].astype(jnp.bfloat16)   # [m2, ndf]
        acc = acc + jnp.dot(g_t, w2t_ref[t],
                            preferred_element_type=jnp.float32)   # [m2, oc2]
    a2 = _leaky_relu(acc)                                      # [16, 2ndf] f32

    # ---- layer 3: full-window conv, OC=1 -> VPU multiply + XLU reduce ------
    row = jnp.sum(a2 * w3_ref[...], axis=1, keepdims=True)     # [16, 1]
    logit = jnp.sum(row, axis=0, keepdims=True) + b3_ref[...]  # [1, 1]
    prob = jax.nn.sigmoid(logit)                               # [1, 1] f32

    # lane-dense store: broadcast across 128 lanes, wrapper keeps lane 0
    o_ref[0] = jnp.broadcast_to(prob, (1, LANES))


# ----------------------------------------------------------------------------
# Parameter construction / one-time reordering
# ----------------------------------------------------------------------------
def init_params(key, in_ch=4, ndf=8):
    """Raw parameters in PyTorch Conv2d layout (OIHW weights, 1-D biases)."""
    k1, k2, k3 = jax.random.split(key, 3)
    return {
        "w1": 0.02 * jax.random.normal(k1, (ndf, in_ch, KH, KW), jnp.float32),
        "b1": jnp.zeros((ndf,), jnp.float32),
        "w2": 0.02 * jax.random.normal(k2, (2 * ndf, ndf, KH, KW), jnp.float32),
        "b2": jnp.zeros((2 * ndf,), jnp.float32),
        "w3": 0.02 * jax.random.normal(k3, (1, 2 * ndf, KH, KW), jnp.float32),
        "b3": jnp.zeros((1,), jnp.float32),
    }


def _build_tap_selectors(in_hw, out_hw, k, stride, pad):
    """sel[t, p_out, p_in] = 1 iff tap t of output position p_out reads
    (unpadded) input position p_in; taps falling on the zero padding stay 0."""
    sel = np.zeros((k * k, out_hw * out_hw, in_hw * in_hw), np.float32)
    for i in range(k):
        for j in range(k):
            t = i * k + j
            for ho in range(out_hw):
                for wo in range(out_hw):
                    h = stride * ho + i - pad
                    w = stride * wo + j - pad
                    if 0 <= h < in_hw and 0 <= w < in_hw:
                        sel[t, ho * out_hw + wo, h * in_hw + w] = 1.0
    return sel


def prepare_params(params, in_ch=4, ndf=8, in_hw=16):
    """One-time reordering of PyTorch-layout weights into kernel layouts."""
    oh1 = (in_hw + 2 - KH) // 2 + 1          # 8 for a 16x16 input
    oh2 = (oh1 + 2 - KH) // 2 + 1            # 4
    assert (oh2 - KH) // 1 + 1 == 1, "final conv expects a 4x4 feature map"

    # conv1 weight as an im2col matmul weight: [KH*KW*C, ndf]
    w1_mat = jnp.transpose(params["w1"], (2, 3, 1, 0)).reshape(KH * KW * in_ch, ndf)
    # conv2 weight split per tap: w2_taps[t, c, oc] = w2[oc, c, i, j], t = i*KW+j
    w2_taps = jnp.transpose(params["w2"], (2, 3, 1, 0)).reshape(KH * KW, ndf, 2 * ndf)
    # conv3 weight as a [spatial, channel] mask for the elementwise reduce
    w3_mat = jnp.transpose(params["w3"], (2, 3, 1, 0)).reshape(KH * KW, 2 * ndf)
    # conv2 stride/pad geometry as stacked 0/1 selection matrices
    selbig = _build_tap_selectors(oh1, oh2, KH, stride=2, pad=1)
    selbig = selbig.reshape(KH * KW * oh2 * oh2, oh1 * oh1)

    return {
        "w1_mat": w1_mat.astype(jnp.bfloat16),
        "b1": params["b1"].reshape(1, ndf).astype(jnp.float32),
        "selbig": jnp.asarray(selbig, dtype=jnp.bfloat16),
        "w2_taps": w2_taps.astype(jnp.bfloat16),
        "b2": params["b2"].reshape(1, 2 * ndf).astype(jnp.float32),
        "w3_mat": w3_mat.astype(jnp.float32),
        "b3": params["b3"].reshape(1, 1).astype(jnp.float32),
    }


# ----------------------------------------------------------------------------
# Forward
# ----------------------------------------------------------------------------
def _im2col_l1(x_nhwc, k, stride, pad):
    """Layer-1 im2col (XLA). Rows ordered (ho*ow + wo), columns (i, j, c)."""
    x = jnp.pad(x_nhwc, ((0, 0), (pad, pad), (pad, pad), (0, 0)))
    n, hh, ww, c = x.shape
    oh = (hh - k) // stride + 1
    ow = (ww - k) // stride + 1
    slabs = [
        x[:, i:i + stride * (oh - 1) + 1:stride,
             j:j + stride * (ow - 1) + 1:stride, :]
        for i in range(k) for j in range(k)
    ]
    p = jnp.concatenate(slabs, axis=-1)                    # [n, oh, ow, k*k*c]
    return p.reshape(n, oh * ow, k * k * c)


@jax.jit
def dcgan_discriminator_forward(prep, x_nchw):
    n = x_nchw.shape[0]
    x = jnp.transpose(x_nchw, (0, 2, 3, 1))                # NCHW -> NHWC
    p1 = _im2col_l1(x, KH, stride=2, pad=1).astype(jnp.bfloat16)  # [N, 64, K1]
    m1, k1 = p1.shape[1], p1.shape[2]

    ndf = prep["w1_mat"].shape[1]
    oc2 = prep["w2_taps"].shape[2]
    sel_rows = prep["selbig"].shape[0]

    out = pl.pallas_call(
        _dcgan_disc_kernel,
        out_shape=jax.ShapeDtypeStruct((n, 1, LANES), jnp.float32),
        grid=(n,),
        in_specs=[
            pl.BlockSpec((1, m1, k1), lambda i: (i, 0, 0)),            # patches
            pl.BlockSpec((k1, ndf), lambda i: (0, 0)),                 # w1
            pl.BlockSpec((1, ndf), lambda i: (0, 0)),                  # b1
            pl.BlockSpec((sel_rows, m1), lambda i: (0, 0)),            # tap selectors
            pl.BlockSpec((KH * KW, ndf, oc2), lambda i: (0, 0, 0)),    # w2 taps
            pl.BlockSpec((1, oc2), lambda i: (0, 0)),                  # b2
            pl.BlockSpec((KH * KW, oc2), lambda i: (0, 0)),            # w3
            pl.BlockSpec((1, 1), lambda i: (0, 0)),                    # b3
        ],
        out_specs=pl.BlockSpec((1, 1, LANES), lambda i: (i, 0, 0)),
        compiler_params=pltpu.CompilerParams(
            dimension_semantics=("parallel",)),
    )(p1, prep["w1_mat"], prep["b1"], prep["selbig"], prep["w2_taps"],
      prep["b2"], prep["w3_mat"], prep["b3"])

    # keep lane 0 of the lane-dense store, return PyTorch-shaped NCHW result
    return out[:, 0, 0].reshape(n, 1, 1, 1)


# ----------------------------------------------------------------------------
# Pure-XLA reference (f32) for correctness checking
# ----------------------------------------------------------------------------
def _reference_forward(params, x_nchw):
    def conv(x, w, b, stride, pad):
        y = jax.lax.conv_general_dilated(
            x, w, window_strides=(stride, stride),
            padding=((pad, pad), (pad, pad)),
            dimension_numbers=("NCHW", "OIHW", "NCHW"))
        return y + b.reshape(1, -1, 1, 1)

    y = _leaky_relu(conv(x_nchw, params["w1"], params["b1"], 2, 1))
    y = _leaky_relu(conv(y, params["w2"], params["b2"], 2, 1))
    return jax.nn.sigmoid(conv(y, params["w3"], params["b3"], 1, 0))


if __name__ == "__main__":
    key = jax.random.PRNGKey(0)
    k_params, k_input = jax.random.split(key)

    batch, in_ch, spatial, ndf = 2, 4, 16, 8
    params = init_params(k_params, in_ch=in_ch, ndf=ndf)
    prep = prepare_params(params, in_ch=in_ch, ndf=ndf, in_hw=spatial)
    x = jax.random.normal(k_input, (batch, in_ch, spatial, spatial), jnp.float32)

    out = dcgan_discriminator_forward(prep, x)
    out = jax.block_until_ready(out)

    assert out.shape == (batch, 1, 1, 1), out.shape
    assert out.dtype == jnp.float32
    assert bool(jnp.all((out >= 0.0) & (out <= 1.0)))       # sigmoid range

    ref = _reference_forward(params, x)
    # bf16 MXU operands + f32 accumulation -> loose-but-meaningful tolerance
    assert bool(jnp.allclose(out, ref, atol=1e-2)), (out, ref)

    print("KERNEL_OK")
</pallas_src>

<mosaic_0001>
module attributes {stable_mosaic.version = 11 : i64} {
  func.func @_dcgan_disc_kernel(%arg0: i32, %arg1: memref<1x64x64xbf16, #tpu.memory_space<vmem>>, %arg2: memref<64x8xbf16, #tpu.memory_space<vmem>>, %arg3: memref<1x8xf32, #tpu.memory_space<vmem>>, %arg4: memref<256x64xbf16, #tpu.memory_space<vmem>>, %arg5: memref<16x8x16xbf16, #tpu.memory_space<vmem>>, %arg6: memref<1x16xf32, #tpu.memory_space<vmem>>, %arg7: memref<16x16xf32, #tpu.memory_space<vmem>>, %arg8: memref<1x1xf32, #tpu.memory_space<vmem>>, %arg9: memref<1x1x128xf32, #tpu.memory_space<vmem>>) attributes {dimension_semantics = [#tpu.dimension_semantics<parallel>], iteration_bounds = array<i64: 2>, scalar_prefetch = 0 : i64, scratch_operands = 0 : i64, tpu.core_type = #tpu.core_type<tc>, window_params = [{transform_indices = @transform_0, window_bounds = array<i64: 1, 64, 64>}, {pipeline_mode = #tpu.pipeline_mode<synchronous>, transform_indices = @transform_1, window_bounds = array<i64: 64, 8>}, {pipeline_mode = #tpu.pipeline_mode<synchronous>, transform_indices = @transform_2, window_bounds = array<i64: 1, 8>}, {pipeline_mode = #tpu.pipeline_mode<synchronous>, transform_indices = @transform_3, window_bounds = array<i64: 256, 64>}, {pipeline_mode = #tpu.pipeline_mode<synchronous>, transform_indices = @transform_4, window_bounds = array<i64: 16, 8, 16>}, {pipeline_mode = #tpu.pipeline_mode<synchronous>, transform_indices = @transform_5, window_bounds = array<i64: 1, 16>}, {pipeline_mode = #tpu.pipeline_mode<synchronous>, transform_indices = @transform_6, window_bounds = array<i64: 16, 16>}, {pipeline_mode = #tpu.pipeline_mode<synchronous>, transform_indices = @transform_7, window_bounds = array<i64: 1, 1>}, {transform_indices = @transform_8, window_bounds = array<i64: 1, 1, 128>}]} {
    %c0 = arith.constant 0 : index
    %c0_0 = arith.constant 0 : index
    %c0_1 = arith.constant 0 : index
    %0 = vector.load %arg1[%c0, %c0_0, %c0_1] : memref<1x64x64xbf16, #tpu.memory_space<vmem>>, vector<1x64x64xbf16>
    %1 = vector.shape_cast %0 : vector<1x64x64xbf16> to vector<64x64xbf16>
    %c0_2 = arith.constant 0 : index
    %c0_3 = arith.constant 0 : index
    %2 = vector.load %arg2[%c0_2, %c0_3] : memref<64x8xbf16, #tpu.memory_space<vmem>>, vector<64x8xbf16>
    %cst = arith.constant dense<0.000000e+00> : vector<64x8xf32>
    %3 = tpu.matmul %1, %2, %cst {dimension_numbers = #tpu.dot_dimension_numbers<[1], [0], [0], [1], [0, 0, 1, 1], [], []>} : vector<64x64xbf16>, vector<64x8xbf16>, vector<64x8xf32> -> vector<64x8xf32>
    %c0_4 = arith.constant 0 : index
    %c0_5 = arith.constant 0 : index
    %4 = vector.load %arg3[%c0_4, %c0_5] : memref<1x8xf32, #tpu.memory_space<vmem>>, vector<1x8xf32>
    %5 = vector.broadcast %4 : vector<1x8xf32> to vector<64x8xf32>
    %6 = arith.addf %3, %5 : vector<64x8xf32>
    %cst_6 = arith.constant 0.000000e+00 : f32
    %7 = vector.broadcast %cst_6 : f32 to vector<64x8xf32>
    %8 = arith.cmpf ogt, %6, %7 : vector<64x8xf32>
    %cst_7 = arith.constant 2.000000e-01 : f32
    %9 = vector.broadcast %cst_7 : f32 to vector<64x8xf32>
    %10 = arith.mulf %9, %6 : vector<64x8xf32>
    %11 = arith.select %8, %6, %10 : vector<64x8xi1>, vector<64x8xf32>
    %12 = arith.truncf %11 : vector<64x8xf32> to vector<64x8xbf16>
    %c0_8 = arith.constant 0 : index
    %c0_9 = arith.constant 0 : index
    %13 = vector.load %arg4[%c0_8, %c0_9] : memref<256x64xbf16, #tpu.memory_space<vmem>>, vector<256x64xbf16>
    %cst_10 = arith.constant dense<0.000000e+00> : vector<256x8xf32>
    %14 = tpu.matmul %13, %12, %cst_10 {dimension_numbers = #tpu.dot_dimension_numbers<[1], [0], [0], [1], [0, 0, 1, 1], [], []>} : vector<256x64xbf16>, vector<64x8xbf16>, vector<256x8xf32> -> vector<256x8xf32>
    %cst_11 = arith.constant 0.000000e+00 : f32
    %15 = vector.broadcast %cst_11 : f32 to vector<16x16xf32>
    %c0_12 = arith.constant 0 : index
    %c0_13 = arith.constant 0 : index
    %16 = vector.load %arg6[%c0_12, %c0_13] : memref<1x16xf32, #tpu.memory_space<vmem>>, vector<1x16xf32>
    %17 = vector.broadcast %16 : vector<1x16xf32> to vector<16x16xf32>
    %18 = arith.addf %15, %17 : vector<16x16xf32>
    %19 = vector.extract_strided_slice %14 {offsets = [0, 0], sizes = [16, 8], strides = [1, 1]} : vector<256x8xf32> to vector<16x8xf32>
    %20 = arith.truncf %19 : vector<16x8xf32> to vector<16x8xbf16>
    %c0_14 = arith.constant 0 : index
    %c0_15 = arith.constant 0 : index
    %c0_16 = arith.constant 0 : index
    %21 = vector.load %arg5[%c0_14, %c0_15, %c0_16] : memref<16x8x16xbf16, #tpu.memory_space<vmem>>, vector<1x8x16xbf16>
    %22 = vector.shape_cast %21 : vector<1x8x16xbf16> to vector<8x16xbf16>
    %cst_17 = arith.constant dense<0.000000e+00> : vector<16x16xf32>
    %23 = tpu.matmul %20, %22, %cst_17 {dimension_numbers = #tpu.dot_dimension_numbers<[1], [0], [0], [1], [0, 0, 1, 1], [], []>} : vector<16x8xbf16>, vector<8x16xbf16>, vector<16x16xf32> -> vector<16x16xf32>
    %24 = arith.addf %18, %23 : vector<16x16xf32>
    %25 = vector.extract_strided_slice %14 {offsets = [16, 0], sizes = [16, 8], strides = [1, 1]} : vector<256x8xf32> to vector<16x8xf32>
    %26 = arith.truncf %25 : vector<16x8xf32> to vector<16x8xbf16>
    %c1 = arith.constant 1 : index
    %c0_18 = arith.constant 0 : index
    %c0_19 = arith.constant 0 : index
    %27 = vector.load %arg5[%c1, %c0_18, %c0_19] : memref<16x8x16xbf16, #tpu.memory_space<vmem>>, vector<1x8x16xbf16>
    %28 = vector.shape_cast %27 : vector<1x8x16xbf16> to vector<8x16xbf16>
    %cst_20 = arith.constant dense<0.000000e+00> : vector<16x16xf32>
    %29 = tpu.matmul %26, %28, %cst_20 {dimension_numbers = #tpu.dot_dimension_numbers<[1], [0], [0], [1], [0, 0, 1, 1], [], []>} : vector<16x8xbf16>, vector<8x16xbf16>, vector<16x16xf32> -> vector<16x16xf32>
    %30 = arith.addf %24, %29 : vector<16x16xf32>
    %31 = vector.extract_strided_slice %14 {offsets = [32, 0], sizes = [16, 8], strides = [1, 1]} : vector<256x8xf32> to vector<16x8xf32>
    %32 = arith.truncf %31 : vector<16x8xf32> to vector<16x8xbf16>
    %c2 = arith.constant 2 : index
    %c0_21 = arith.constant 0 : index
    %c0_22 = arith.constant 0 : index
    %33 = vector.load %arg5[%c2, %c0_21, %c0_22] : memref<16x8x16xbf16, #tpu.memory_space<vmem>>, vector<1x8x16xbf16>
    %34 = vector.shape_cast %33 : vector<1x8x16xbf16> to vector<8x16xbf16>
    %cst_23 = arith.constant dense<0.000000e+00> : vector<16x16xf32>
    %35 = tpu.matmul %32, %34, %cst_23 {dimension_numbers = #tpu.dot_dimension_numbers<[1], [0], [0], [1], [0, 0, 1, 1], [], []>} : vector<16x8xbf16>, vector<8x16xbf16>, vector<16x16xf32> -> vector<16x16xf32>
    %36 = arith.addf %30, %35 : vector<16x16xf32>
    %37 = vector.extract_strided_slice %14 {offsets = [48, 0], sizes = [16, 8], strides = [1, 1]} : vector<256x8xf32> to vector<16x8xf32>
    %38 = arith.truncf %37 : vector<16x8xf32> to vector<16x8xbf16>
    %c3 = arith.constant 3 : index
    %c0_24 = arith.constant 0 : index
    %c0_25 = arith.constant 0 : index
    %39 = vector.load %arg5[%c3, %c0_24, %c0_25] : memref<16x8x16xbf16, #tpu.memory_space<vmem>>, vector<1x8x16xbf16>
    %40 = vector.shape_cast %39 : vector<1x8x16xbf16> to vector<8x16xbf16>
    %cst_26 = arith.constant dense<0.000000e+00> : vector<16x16xf32>
    %41 = tpu.matmul %38, %40, %cst_26 {dimension_numbers = #tpu.dot_dimension_numbers<[1], [0], [0], [1], [0, 0, 1, 1], [], []>} : vector<16x8xbf16>, vector<8x16xbf16>, vector<16x16xf32> -> vector<16x16xf32>
    %42 = arith.addf %36, %41 : vector<16x16xf32>
    %43 = vector.extract_strided_slice %14 {offsets = [64, 0], sizes = [16, 8], strides = [1, 1]} : vector<256x8xf32> to vector<16x8xf32>
    %44 = arith.truncf %43 : vector<16x8xf32> to vector<16x8xbf16>
    %c4 = arith.constant 4 : index
    %c0_27 = arith.constant 0 : index
    %c0_28 = arith.constant 0 : index
    %45 = vector.load %arg5[%c4, %c0_27, %c0_28] : memref<16x8x16xbf16, #tpu.memory_space<vmem>>, vector<1x8x16xbf16>
    %46 = vector.shape_cast %45 : vector<1x8x16xbf16> to vector<8x16xbf16>
    %cst_29 = arith.constant dense<0.000000e+00> : vector<16x16xf32>
    %47 = tpu.matmul %44, %46, %cst_29 {dimension_numbers = #tpu.dot_dimension_numbers<[1], [0], [0], [1], [0, 0, 1, 1], [], []>} : vector<16x8xbf16>, vector<8x16xbf16>, vector<16x16xf32> -> vector<16x16xf32>
    %48 = arith.addf %42, %47 : vector<16x16xf32>
    %49 = vector.extract_strided_slice %14 {offsets = [80, 0], sizes = [16, 8], strides = [1, 1]} : vector<256x8xf32> to vector<16x8xf32>
    %50 = arith.truncf %49 : vector<16x8xf32> to vector<16x8xbf16>
    %c5 = arith.constant 5 : index
    %c0_30 = arith.constant 0 : index
    %c0_31 = arith.constant 0 : index
    %51 = vector.load %arg5[%c5, %c0_30, %c0_31] : memref<16x8x16xbf16, #tpu.memory_space<vmem>>, vector<1x8x16xbf16>
    %52 = vector.shape_cast %51 : vector<1x8x16xbf16> to vector<8x16xbf16>
    %cst_32 = arith.constant dense<0.000000e+00> : vector<16x16xf32>
    %53 = tpu.matmul %50, %52, %cst_32 {dimension_numbers = #tpu.dot_dimension_numbers<[1], [0], [0], [1], [0, 0, 1, 1], [], []>} : vector<16x8xbf16>, vector<8x16xbf16>, vector<16x16xf32> -> vector<16x16xf32>
    %54 = arith.addf %48, %53 : vector<16x16xf32>
    %55 = vector.extract_strided_slice %14 {offsets = [96, 0], sizes = [16, 8], strides = [1, 1]} : vector<256x8xf32> to vector<16x8xf32>
    %56 = arith.truncf %55 : vector<16x8xf32> to vector<16x8xbf16>
    %c6 = arith.constant 6 : index
    %c0_33 = arith.constant 0 : index
    %c0_34 = arith.constant 0 : index
    %57 = vector.load %arg5[%c6, %c0_33, %c0_34] : memref<16x8x16xbf16, #tpu.memory_space<vmem>>, vector<1x8x16xbf16>
    %58 = vector.shape_cast %57 : vector<1x8x16xbf16> to vector<8x16xbf16>
    %cst_35 = arith.constant dense<0.000000e+00> : vector<16x16xf32>
    %59 = tpu.matmul %56, %58, %cst_35 {dimension_numbers = #tpu.dot_dimension_numbers<[1], [0], [0], [1], [0, 0, 1, 1], [], []>} : vector<16x8xbf16>, vector<8x16xbf16>, vector<16x16xf32> -> vector<16x16xf32>
    %60 = arith.addf %54, %59 : vector<16x16xf32>
    %61 = vector.extract_strided_slice %14 {offsets = [112, 0], sizes = [16, 8], strides = [1, 1]} : vector<256x8xf32> to vector<16x8xf32>
    %62 = arith.truncf %61 : vector<16x8xf32> to vector<16x8xbf16>
    %c7 = arith.constant 7 : index
    %c0_36 = arith.constant 0 : index
    %c0_37 = arith.constant 0 : index
    %63 = vector.load %arg5[%c7, %c0_36, %c0_37] : memref<16x8x16xbf16, #tpu.memory_space<vmem>>, vector<1x8x16xbf16>
    %64 = vector.shape_cast %63 : vector<1x8x16xbf16> to vector<8x16xbf16>
    %cst_38 = arith.constant dense<0.000000e+00> : vector<16x16xf32>
    %65 = tpu.matmul %62, %64, %cst_38 {dimension_numbers = #tpu.dot_dimension_numbers<[1], [0], [0], [1], [0, 0, 1, 1], [], []>} : vector<16x8xbf16>, vector<8x16xbf16>, vector<16x16xf32> -> vector<16x16xf32>
    %66 = arith.addf %60, %65 : vector<16x16xf32>
    %67 = vector.extract_strided_slice %14 {offsets = [128, 0], sizes = [16, 8], strides = [1, 1]} : vector<256x8xf32> to vector<16x8xf32>
    %68 = arith.truncf %67 : vector<16x8xf32> to vector<16x8xbf16>
    %c8 = arith.constant 8 : index
    %c0_39 = arith.constant 0 : index
    %c0_40 = arith.constant 0 : index
    %69 = vector.load %arg5[%c8, %c0_39, %c0_40] : memref<16x8x16xbf16, #tpu.memory_space<vmem>>, vector<1x8x16xbf16>
    %70 = vector.shape_cast %69 : vector<1x8x16xbf16> to vector<8x16xbf16>
    %cst_41 = arith.constant dense<0.000000e+00> : vector<16x16xf32>
    %71 = tpu.matmul %68, %70, %cst_41 {dimension_numbers = #tpu.dot_dimension_numbers<[1], [0], [0], [1], [0, 0, 1, 1], [], []>} : vector<16x8xbf16>, vector<8x16xbf16>, vector<16x16xf32> -> vector<16x16xf32>
    %72 = arith.addf %66, %71 : vector<16x16xf32>
    %73 = vector.extract_strided_slice %14 {offsets = [144, 0], sizes = [16, 8], strides = [1, 1]} : vector<256x8xf32> to vector<16x8xf32>
    %74 = arith.truncf %73 : vector<16x8xf32> to vector<16x8xbf16>
    %c9 = arith.constant 9 : index
    %c0_42 = arith.constant 0 : index
    %c0_43 = arith.constant 0 : index
    %75 = vector.load %arg5[%c9, %c0_42, %c0_43] : memref<16x8x16xbf16, #tpu.memory_space<vmem>>, vector<1x8x16xbf16>
    %76 = vector.shape_cast %75 : vector<1x8x16xbf16> to vector<8x16xbf16>
    %cst_44 = arith.constant dense<0.000000e+00> : vector<16x16xf32>
    %77 = tpu.matmul %74, %76, %cst_44 {dimension_numbers = #tpu.dot_dimension_numbers<[1], [0], [0], [1], [0, 0, 1, 1], [], []>} : vector<16x8xbf16>, vector<8x16xbf16>, vector<16x16xf32> -> vector<16x16xf32>
    %78 = arith.addf %72, %77 : vector<16x16xf32>
    %79 = vector.extract_strided_slice %14 {offsets = [160, 0], sizes = [16, 8], strides = [1, 1]} : vector<256x8xf32> to vector<16x8xf32>
    %80 = arith.truncf %79 : vector<16x8xf32> to vector<16x8xbf16>
    %c10 = arith.constant 10 : index
    %c0_45 = arith.constant 0 : index
    %c0_46 = arith.constant 0 : index
    %81 = vector.load %arg5[%c10, %c0_45, %c0_46] : memref<16x8x16xbf16, #tpu.memory_space<vmem>>, vector<1x8x16xbf16>
    %82 = vector.shape_cast %81 : vector<1x8x16xbf16> to vector<8x16xbf16>
    %cst_47 = arith.constant dense<0.000000e+00> : vector<16x16xf32>
    %83 = tpu.matmul %80, %82, %cst_47 {dimension_numbers = #tpu.dot_dimension_numbers<[1], [0], [0], [1], [0, 0, 1, 1], [], []>} : vector<16x8xbf16>, vector<8x16xbf16>, vector<16x16xf32> -> vector<16x16xf32>
    %84 = arith.addf %78, %83 : vector<16x16xf32>
    %85 = vector.extract_strided_slice %14 {offsets = [176, 0], sizes = [16, 8], strides = [1, 1]} : vector<256x8xf32> to vector<16x8xf32>
    %86 = arith.truncf %85 : vector<16x8xf32> to vector<16x8xbf16>
    %c11 = arith.constant 11 : index
    %c0_48 = arith.constant 0 : index
    %c0_49 = arith.constant 0 : index
    %87 = vector.load %arg5[%c11, %c0_48, %c0_49] : memref<16x8x16xbf16, #tpu.memory_space<vmem>>, vector<1x8x16xbf16>
    %88 = vector.shape_cast %87 : vector<1x8x16xbf16> to vector<8x16xbf16>
    %cst_50 = arith.constant dense<0.000000e+00> : vector<16x16xf32>
    %89 = tpu.matmul %86, %88, %cst_50 {dimension_numbers = #tpu.dot_dimension_numbers<[1], [0], [0], [1], [0, 0, 1, 1], [], []>} : vector<16x8xbf16>, vector<8x16xbf16>, vector<16x16xf32> -> vector<16x16xf32>
    %90 = arith.addf %84, %89 : vector<16x16xf32>
    %91 = vector.extract_strided_slice %14 {offsets = [192, 0], sizes = [16, 8], strides = [1, 1]} : vector<256x8xf32> to vector<16x8xf32>
    %92 = arith.truncf %91 : vector<16x8xf32> to vector<16x8xbf16>
    %c12 = arith.constant 12 : index
    %c0_51 = arith.constant 0 : index
    %c0_52 = arith.constant 0 : index
    %93 = vector.load %arg5[%c12, %c0_51, %c0_52] : memref<16x8x16xbf16, #tpu.memory_space<vmem>>, vector<1x8x16xbf16>
    %94 = vector.shape_cast %93 : vector<1x8x16xbf16> to vector<8x16xbf16>
    %cst_53 = arith.constant dense<0.000000e+00> : vector<16x16xf32>
    %95 = tpu.matmul %92, %94, %cst_53 {dimension_numbers = #tpu.dot_dimension_numbers<[1], [0], [0], [1], [0, 0, 1, 1], [], []>} : vector<16x8xbf16>, vector<8x16xbf16>, vector<16x16xf32> -> vector<16x16xf32>
    %96 = arith.addf %90, %95 : vector<16x16xf32>
    %97 = vector.extract_strided_slice %14 {offsets = [208, 0], sizes = [16, 8], strides = [1, 1]} : vector<256x8xf32> to vector<16x8xf32>
    %98 = arith.truncf %97 : vector<16x8xf32> to vector<16x8xbf16>
    %c13 = arith.constant 13 : index
    %c0_54 = arith.constant 0 : index
    %c0_55 = arith.constant 0 : index
    %99 = vector.load %arg5[%c13, %c0_54, %c0_55] : memref<16x8x16xbf16, #tpu.memory_space<vmem>>, vector<1x8x16xbf16>
    %100 = vector.shape_cast %99 : vector<1x8x16xbf16> to vector<8x16xbf16>
    %cst_56 = arith.constant dense<0.000000e+00> : vector<16x16xf32>
    %101 = tpu.matmul %98, %100, %cst_56 {dimension_numbers = #tpu.dot_dimension_numbers<[1], [0], [0], [1], [0, 0, 1, 1], [], []>} : vector<16x8xbf16>, vector<8x16xbf16>, vector<16x16xf32> -> vector<16x16xf32>
    %102 = arith.addf %96, %101 : vector<16x16xf32>
    %103 = vector.extract_strided_slice %14 {offsets = [224, 0], sizes = [16, 8], strides = [1, 1]} : vector<256x8xf32> to vector<16x8xf32>
    %104 = arith.truncf %103 : vector<16x8xf32> to vector<16x8xbf16>
    %c14 = arith.constant 14 : index
    %c0_57 = arith.constant 0 : index
    %c0_58 = arith.constant 0 : index
    %105 = vector.load %arg5[%c14, %c0_57, %c0_58] : memref<16x8x16xbf16, #tpu.memory_space<vmem>>, vector<1x8x16xbf16>
    %106 = vector.shape_cast %105 : vector<1x8x16xbf16> to vector<8x16xbf16>
    %cst_59 = arith.constant dense<0.000000e+00> : vector<16x16xf32>
    %107 = tpu.matmul %104, %106, %cst_59 {dimension_numbers = #tpu.dot_dimension_numbers<[1], [0], [0], [1], [0, 0, 1, 1], [], []>} : vector<16x8xbf16>, vector<8x16xbf16>, vector<16x16xf32> -> vector<16x16xf32>
    %108 = arith.addf %102, %107 : vector<16x16xf32>
    %109 = vector.extract_strided_slice %14 {offsets = [240, 0], sizes = [16, 8], strides = [1, 1]} : vector<256x8xf32> to vector<16x8xf32>
    %110 = arith.truncf %109 : vector<16x8xf32> to vector<16x8xbf16>
    %c15 = arith.constant 15 : index
    %c0_60 = arith.constant 0 : index
    %c0_61 = arith.constant 0 : index
    %111 = vector.load %arg5[%c15, %c0_60, %c0_61] : memref<16x8x16xbf16, #tpu.memory_space<vmem>>, vector<1x8x16xbf16>
    %112 = vector.shape_cast %111 : vector<1x8x16xbf16> to vector<8x16xbf16>
    %cst_62 = arith.constant dense<0.000000e+00> : vector<16x16xf32>
    %113 = tpu.matmul %110, %112, %cst_62 {dimension_numbers = #tpu.dot_dimension_numbers<[1], [0], [0], [1], [0, 0, 1, 1], [], []>} : vector<16x8xbf16>, vector<8x16xbf16>, vector<16x16xf32> -> vector<16x16xf32>
    %114 = arith.addf %108, %113 : vector<16x16xf32>
    %cst_63 = arith.constant 0.000000e+00 : f32
    %115 = vector.broadcast %cst_63 : f32 to vector<16x16xf32>
    %116 = arith.cmpf ogt, %114, %115 : vector<16x16xf32>
    %cst_64 = arith.constant 2.000000e-01 : f32
    %117 = vector.broadcast %cst_64 : f32 to vector<16x16xf32>
    %118 = arith.mulf %117, %114 : vector<16x16xf32>
    %119 = arith.select %116, %114, %118 : vector<16x16xi1>, vector<16x16xf32>
    %c0_65 = arith.constant 0 : index
    %c0_66 = arith.constant 0 : index
    %120 = vector.load %arg7[%c0_65, %c0_66] : memref<16x16xf32, #tpu.memory_space<vmem>>, vector<16x16xf32>
    %121 = arith.mulf %119, %120 : vector<16x16xf32>
    %cst_67 = arith.constant dense<0.000000e+00> : vector<16xf32>
    %122 = vector.multi_reduction <add>, %121, %cst_67 [1] : vector<16x16xf32> to vector<16xf32>
    %123 = vector.shape_cast %122 : vector<16xf32> to vector<16x1xf32>
    %cst_68 = arith.constant dense<0.000000e+00> : vector<1xf32>
    %124 = vector.multi_reduction <add>, %123, %cst_68 [0] : vector<16x1xf32> to vector<1xf32>
    %125 = vector.shape_cast %124 : vector<1xf32> to vector<1x1xf32>
    %c0_69 = arith.constant 0 : index
    %c0_70 = arith.constant 0 : index
    %126 = vector.load %arg8[%c0_69, %c0_70] : memref<1x1xf32, #tpu.memory_space<vmem>>, vector<1x1xf32>
    %127 = arith.addf %125, %126 : vector<1x1xf32>
    %128 = arith.negf %127 : vector<1x1xf32>
    %129 = math.exp %128 : vector<1x1xf32>
    %cst_71 = arith.constant 1.000000e+00 : f32
    %130 = vector.broadcast %cst_71 : f32 to vector<1x1xf32>
    %131 = arith.addf %130, %129 : vector<1x1xf32>
    %132 = arith.divf %130, %131 : vector<1x1xf32>
    %133 = vector.shape_cast %132 : vector<1x1xf32> to vector<1x1xf32>
    %134 = vector.broadcast %133 : vector<1x1xf32> to vector<1x128xf32>
    %c0_72 = arith.constant 0 : index
    %c0_73 = arith.constant 0 : index
    %c0_74 = arith.constant 0 : index
    %135 = vector.load %arg9[%c0_72, %c0_73, %c0_74] : memref<1x1x128xf32, #tpu.memory_space<vmem>>, vector<1x1x128xf32>
    %136 = vector.shape_cast %135 : vector<1x1x128xf32> to vector<1x128xf32>
    %137 = vector.shape_cast %134 : vector<1x128xf32> to vector<1x1x128xf32>
    tpu.vector_store %arg9[%c0_72, %c0_73, %c0_74], %137 {strides = array<i32>} : memref<1x1x128xf32, #tpu.memory_space<vmem>>, vector<1x1x128xf32>,
    return
  }
  func.func @transform_0(%arg0: i32) -> (i32, i32, i32) {
    %c0_i32 = arith.constant 0 : i32
    %c0_i32_0 = arith.constant 0 : i32
    %c0_i32_1 = arith.constant 0 : i32
    return %arg0, %c0_i32, %c0_i32_0 : i32, i32, i32
  }
  func.func @transform_1(%arg0: i32) -> (i32, i32) {
    %c0_i32 = arith.constant 0 : i32
    %c0_i32_0 = arith.constant 0 : i32
    %c0_i32_1 = arith.constant 0 : i32
    return %c0_i32, %c0_i32_0 : i32, i32
  }
  func.func @transform_2(%arg0: i32) -> (i32, i32) {
    %c0_i32 = arith.constant 0 : i32
    %c0_i32_0 = arith.constant 0 : i32
    %c0_i32_1 = arith.constant 0 : i32
    return %c0_i32, %c0_i32_0 : i32, i32
  }
  func.func @transform_3(%arg0: i32) -> (i32, i32) {
    %c0_i32 = arith.constant 0 : i32
    %c0_i32_0 = arith.constant 0 : i32
    %c0_i32_1 = arith.constant 0 : i32
    return %c0_i32, %c0_i32_0 : i32, i32
  }
  func.func @transform_4(%arg0: i32) -> (i32, i32, i32) {
    %c0_i32 = arith.constant 0 : i32
    %c0_i32_0 = arith.constant 0 : i32
    %c0_i32_1 = arith.constant 0 : i32
    %c0_i32_2 = arith.constant 0 : i32
    return %c0_i32, %c0_i32_0, %c0_i32_1 : i32, i32, i32
  }
  func.func @transform_5(%arg0: i32) -> (i32, i32) {
    %c0_i32 = arith.constant 0 : i32
    %c0_i32_0 = arith.constant 0 : i32
    %c0_i32_1 = arith.constant 0 : i32
    return %c0_i32, %c0_i32_0 : i32, i32
  }
  func.func @transform_6(%arg0: i32) -> (i32, i32) {
    %c0_i32 = arith.constant 0 : i32
    %c0_i32_0 = arith.constant 0 : i32
    %c0_i32_1 = arith.constant 0 : i32
    return %c0_i32, %c0_i32_0 : i32, i32
  }
  func.func @transform_7(%arg0: i32) -> (i32, i32) {
    %c0_i32 = arith.constant 0 : i32
    %c0_i32_0 = arith.constant 0 : i32
    %c0_i32_1 = arith.constant 0 : i32
    return %c0_i32, %c0_i32_0 : i32, i32
  }
  func.func @transform_8(%arg0: i32) -> (i32, i32, i32) {
    %c0_i32 = arith.constant 0 : i32
    %c0_i32_0 = arith.constant 0 : i32
    %c0_i32_1 = arith.constant 0 : i32
    return %arg0, %c0_i32, %c0_i32_0 : i32, i32, i32
  }
}

</mosaic_0001>

<llo_original>
// kernel: dcgan_discriminator_forward.1
$region0: #{dcgan_discriminator_forward.1}
  #allocation0 [shape = 'u32[]', space=smem, size = 0x4, offset = 0x4, fixed_abs, tag = 'smem constant byte address 0x4 - core index']
  #allocation1 [shape = 'u32[72,128]{1,0:T(1,128)}', space=vmem, size = 0x9000, scoped, tag = 'internal scratch']
  #allocation2 [shape = 'f32[1,1]{1,0:T(1,128)S(1)}', space=vmem, size = 0x200, scoped, tag = 'scoped memory for dcgan_discriminator_forward.1']
  %s0 = inlined_call_operand.vmem [shape: bf16[2,64,64], index: 0, kind: input, shape index: {}]
  %s1 = inlined_call_operand.vmem [shape: bf16[64,8], index: 1, kind: input, shape index: {}]
  %s2 = inlined_call_operand.vmem [shape: f32[1,8], index: 2, kind: input, shape index: {}]
  %s3 = inlined_call_operand.vmem [shape: bf16[256,64], index: 3, kind: input, shape index: {}]
  %s4 = inlined_call_operand.vmem [shape: bf16[16,8,16], index: 4, kind: input, shape index: {}]
  %s5 = inlined_call_operand.vmem [shape: f32[1,16], index: 5, kind: input, shape index: {}]
  %s6 = inlined_call_operand.vmem [shape: f32[16,16], index: 6, kind: input, shape index: {}]
  %s7 = inlined_call_operand.<no memory space> [shape: f32[1,1], index: 7, kind: input, shape index: {}]
  %s8 = inlined_call_operand.vmem [shape: f32[2,1,128], index: 8, kind: output, shape index: {}]
  %s9 = sld [smem:[#allocation0]]
  $region65: #{dcgan_discriminator_forward.1} parent=0
    _
  %s11 = ssub.s32 1, %s9
  %s12 = scalar_select 0, %s11, %s9
  %v13 = vstv %s7
  %14 = vst [vmem:[#allocation2] sm:$0x1] %v13
  loop: start=0, step=1, limit=4
  $region2: #{dcgan_discriminator_forward.1} parent=0 // loop_pre_header
    _
  $region3: #{dcgan_discriminator_forward.1} parent=0 // loop_header
    %s16 = sphi 0, %s20
    %p17 = scmp.ge.s32.totalorder %s16, 4
    %s26 = sphi 0, %s28
    %s29 = sphi 0, %s26
    %s30 = sphi 0, %s29
    %s46 = sphi 0, %s30
    %s50 = sphi 0, %s50
    %s52 = sphi 0, %s50
    %s53 = sphi 0, %s52
    %s67 = sphi 0, %s53
    %s71 = sphi 0, %s71
    %s73 = sphi 0, %s71
    %s74 = sphi 0, %s73
    %s88 = sphi 0, %s74
    %s92 = sphi 0, %s92
    %s94 = sphi 0, %s92
    %s95 = sphi 0, %s94
    %s109 = sphi 0, %s95
    %s113 = sphi 0, %s113
    %s115 = sphi 0, %s113
    %s116 = sphi 0, %s115
    %s130 = sphi 0, %s116
    %s134 = sphi 0, %s134
    %s136 = sphi 0, %s134
    %s137 = sphi 0, %s136
    %s151 = sphi 0, %s137
    %s155 = sphi 0, %s155
    %s157 = sphi 0, %s155
    %s158 = sphi 0, %s157
    %s172 = sphi 0, %s158
    %s176 = sphi 0, %s176
    %s178 = sphi 0, %s176
    %s179 = sphi 0, %s178
    %s193 = sphi 0, %s179
    %s199 = sphi 0, %s201
    %s202 = sphi 0, %s199
    %s203 = sphi 0, %s202
    %s219 = sphi 0, %s203
  $region4: #{dcgan_discriminator_forward.1} parent=0 // loop_header_branch
    %19 = sbr.rel (%p17) target = $region8
  $region5: #{dcgan_discriminator_forward.1} parent=0 // loop_body
    %s21 = ssub.s32 %s16, 1
    %s22 = ssub.s32 %s16, 2
    %s23 = sadd.s32 %s16, 1
    %s24 = ssub.s32 %s16, %s23
    %p25 = scmp.eq.s32.totalorder %s24, 0
    %s27 = sadd.s32 %s26, 1
    %s28 = scalar_select %p25, %s26, %s27
    %p31 = pneg %p25
    %p32 = scmp.eq.s32.totalorder %s16, 1
    %p33 = por %p31, %p32
    %p34 = scmp.ne.s32.totalorder %s26, %s29
    %p35 = scmp.eq.s32.totalorder %s16, 0
    %p36 = por %p34, %p35
    %p37 = scmp.ne.s32.totalorder %s26, %s29
    %p38 = scmp.eq.s32.totalorder %s21, 1
    %p39 = por %p37, %p38
    %p40 = scmp.ne.s32.totalorder %s29, %s30
    %p41 = scmp.eq.s32.totalorder %s21, 0
    %p42 = por %p40, %p41
    %p43 = scmp.ne.s32.totalorder %s29, %s30
    %p44 = scmp.eq.s32.totalorder %s22, 1
    %p45 = por %p43, %p44
    %p47 = scmp.ne.s32.totalorder %s30, %s46
    %p48 = scmp.eq.s32.totalorder %s22, 0
    %p49 = por %p47, %p48
    %s51 = sadd.s32 %s50, 1
    %p54 = scmp.eq.s32.totalorder %s16, 1
    %p55 = scmp.ne.s32.totalorder %s50, %s52
    %p56 = scmp.eq.s32.totalorder %s16, 0
    %p57 = por %p55, %p56
    %p58 = scmp.ne.s32.totalorder %s50, %s52
    %p59 = scmp.eq.s32.totalorder %s21, 1
    %p60 = por %p58, %p59
    %p61 = scmp.ne.s32.totalorder %s52, %s53
    %p62 = scmp.eq.s32.totalorder %s21, 0
    %p63 = por %p61, %p62
    %p64 = scmp.ne.s32.totalorder %s52, %s53
    %p65 = scmp.eq.s32.totalorder %s22, 1
    %p66 = por %p64, %p65
    %p68 = scmp.ne.s32.totalorder %s53, %s67
    %p69 = scmp.eq.s32.totalorder %s22, 0
    %p70 = por %p68, %p69
    %s72 = sadd.s32 %s71, 1
    %p75 = scmp.eq.s32.totalorder %s16, 1
    %p76 = scmp.ne.s32.totalorder %s71, %s73
    %p77 = scmp.eq.s32.totalorder %s16, 0
    %p78 = por %p76, %p77
    %p79 = scmp.ne.s32.totalorder %s71, %s73
    %p80 = scmp.eq.s32.totalorder %s21, 1
    %p81 = por %p79, %p80
    %p82 = scmp.ne.s32.totalorder %s73, %s74
    %p83 = scmp.eq.s32.totalorder %s21, 0
    %p84 = por %p82, %p83
    %p85 = scmp.ne.s32.totalorder %s73, %s74
    %p86 = scmp.eq.s32.totalorder %s22, 1
    %p87 = por %p85, %p86
    %p89 = scmp.ne.s32.totalorder %s74, %s88
    %p90 = scmp.eq.s32.totalorder %s22, 0
    %p91 = por %p89, %p90
    %s93 = sadd.s32 %s92, 1
    %p96 = scmp.eq.s32.totalorder %s16, 1
    %p97 = scmp.ne.s32.totalorder %s92, %s94
    %p98 = scmp.eq.s32.totalorder %s16, 0
    %p99 = por %p97, %p98
    %p100 = scmp.ne.s32.totalorder %s92, %s94
    %p101 = scmp.eq.s32.totalorder %s21, 1
    %p102 = por %p100, %p101
    %p103 = scmp.ne.s32.totalorder %s94, %s95
    %p104 = scmp.eq.s32.totalorder %s21, 0
    %p105 = por %p103, %p104
    %p106 = scmp.ne.s32.totalorder %s94, %s95
    %p107 = scmp.eq.s32.totalorder %s22, 1
    %p108 = por %p106, %p107
    %p110 = scmp.ne.s32.totalorder %s95, %s109
    %p111 = scmp.eq.s32.totalorder %s22, 0
    %p112 = por %p110, %p111
    %s114 = sadd.s32 %s113, 1
    %p117 = scmp.eq.s32.totalorder %s16, 1
    %p118 = scmp.ne.s32.totalorder %s113, %s115
    %p119 = scmp.eq.s32.totalorder %s16, 0
    %p120 = por %p118, %p119
    %p121 = scmp.ne.s32.totalorder %s113, %s115
    %p122 = scmp.eq.s32.totalorder %s21, 1
    %p123 = por %p121, %p122
    %p124 = scmp.ne.s32.totalorder %s115, %s116
    %p125 = scmp.eq.s32.totalorder %s21, 0
    %p126 = por %p124, %p125
    %p127 = scmp.ne.s32.totalorder %s115, %s116
    %p128 = scmp.eq.s32.totalorder %s22, 1
    %p129 = por %p127, %p128
    %p131 = scmp.ne.s32.totalorder %s116, %s130
    %p132 = scmp.eq.s32.totalorder %s22, 0
    %p133 = por %p131, %p132
    %s135 = sadd.s32 %s134, 1
    %p138 = scmp.eq.s32.totalorder %s16, 1
    %p139 = scmp.ne.s32.totalorder %s134, %s136
    %p140 = scmp.eq.s32.totalorder %s16, 0
    %p141 = por %p139, %p140
    %p142 = scmp.ne.s32.totalorder %s134, %s136
    %p143 = scmp.eq.s32.totalorder %s21, 1
    %p144 = por %p142, %p143
    %p145 = scmp.ne.s32.totalorder %s136, %s137
    %p146 = scmp.eq.s32.totalorder %s21, 0
    %p147 = por %p145, %p146
    %p148 = scmp.ne.s32.totalorder %s136, %s137
    %p149 = scmp.eq.s32.totalorder %s22, 1
    %p150 = por %p148, %p149
    %p152 = scmp.ne.s32.totalorder %s137, %s151
    %p153 = scmp.eq.s32.totalorder %s22, 0
    %p154 = por %p152, %p153
    %s156 = sadd.s32 %s155, 1
    %p159 = scmp.eq.s32.totalorder %s16, 1
    %p160 = scmp.ne.s32.totalorder %s155, %s157
    %p161 = scmp.eq.s32.totalorder %s16, 0
    %p162 = por %p160, %p161
    %p163 = scmp.ne.s32.totalorder %s155, %s157
    %p164 = scmp.eq.s32.totalorder %s21, 1
    %p165 = por %p163, %p164
    %p166 = scmp.ne.s32.totalorder %s157, %s158
    %p167 = scmp.eq.s32.totalorder %s21, 0
    %p168 = por %p166, %p167
    %p169 = scmp.ne.s32.totalorder %s157, %s158
    %p170 = scmp.eq.s32.totalorder %s22, 1
    %p171 = por %p169, %p170
    %p173 = scmp.ne.s32.totalorder %s158, %s172
    %p174 = scmp.eq.s32.totalorder %s22, 0
    %p175 = por %p173, %p174
    %s177 = sadd.s32 %s176, 1
    %p180 = scmp.eq.s32.totalorder %s16, 1
    %p181 = scmp.ne.s32.totalorder %s176, %s178
    %p182 = scmp.eq.s32.totalorder %s16, 0
    %p183 = por %p181, %p182
    %p184 = scmp.ne.s32.totalorder %s176, %s178
    %p185 = scmp.eq.s32.totalorder %s21, 1
    %p186 = por %p184, %p185
    %p187 = scmp.ne.s32.totalorder %s178, %s179
    %p188 = scmp.eq.s32.totalorder %s21, 0
    %p189 = por %p187, %p188
    %p190 = scmp.ne.s32.totalorder %s178, %s179
    %p191 = scmp.eq.s32.totalorder %s22, 1
    %p192 = por %p190, %p191
    %p194 = scmp.ne.s32.totalorder %s179, %s193
    %p195 = scmp.eq.s32.totalorder %s22, 0
    %p196 = por %p194, %p195
    %s197 = ssub.s32 %s16, %s23
    %p198 = scmp.eq.s32.totalorder %s197, 0
    %s200 = sadd.s32 %s199, 1
    %s201 = scalar_select %p198, %s199, %s200
    %p204 = pneg %p198
    %p205 = scmp.eq.s32.totalorder %s16, 1
    %p206 = por %p204, %p205
    %p207 = scmp.ne.s32.totalorder %s199, %s202
    %p208 = scmp.eq.s32.totalorder %s16, 0
    %p209 = por %p207, %p208
    %p210 = scmp.ne.s32.totalorder %s199, %s202
    %p211 = scmp.eq.s32.totalorder %s21, 1
    %p212 = por %p210, %p211
    %p213 = scmp.ne.s32.totalorder %s202, %s203
    %p214 = scmp.eq.s32.totalorder %s21, 0
    %p215 = por %p213, %p214
    %p216 = scmp.ne.s32.totalorder %s202, %s203
    %p217 = scmp.eq.s32.totalorder %s22, 1
    %p218 = por %p216, %p217
    %p220 = scmp.ne.s32.totalorder %s203, %s219
    %p221 = scmp.eq.s32.totalorder %s22, 0
    %p222 = por %p220, %p221
    %p223 = scmp.le.s32.totalorder 1, %s16
    %p224 = scmp.lt.s32.totalorder %s16, 3
    %p225 = pnand %p223, %p224
    %p226 = pneg %p225
    // Predicated region
    $region9: #{dcgan_discriminator_forward.1} parent=5 // pred_check
      _
    $region10: #{dcgan_discriminator_forward.1} parent=5 // pred_check_branch
      %228 = sbr.rel (%p225) target = $region12
    $region11: #{dcgan_discriminator_forward.1} parent=5 // pred_region
      %s229 = ssub.s32 %s16, 1
      // Predicated region
      $region13: #{dcgan_discriminator_forward.1} parent=11 // pred_check
        %p230 = pneg %p63
      $region14: #{dcgan_discriminator_forward.1} parent=11 // pred_check_branch
        %232 = sbr.rel (%p230) target = $region16
      $region15: #{dcgan_discriminator_forward.1} parent=11 // pred_region
        _
      $region16: #{dcgan_discriminator_forward.1} parent=11 // pred_fallthru
        _
      // Predicated region
      $region17: #{dcgan_discriminator_forward.1} parent=11 // pred_check
        %p233 = pneg %p84
      $region18: #{dcgan_discriminator_forward.1} parent=11 // pred_check_branch
        %235 = sbr.rel (%p233) target = $region20
      $region19: #{dcgan_discriminator_forward.1} parent=11 // pred_region
        _
      $region20: #{dcgan_discriminator_forward.1} parent=11 // pred_fallthru
        _
      // Predicated region
      $region21: #{dcgan_discriminator_forward.1} parent=11 // pred_check
        %p236 = pneg %p105
      $region22: #{dcgan_discriminator_forward.1} parent=11 // pred_check_branch
        %238 = sbr.rel (%p236) target = $region24
      $region23: #{dcgan_discriminator_forward.1} parent=11 // pred_region
        _
      $region24: #{dcgan_discriminator_forward.1} parent=11 // pred_fallthru
        _
      // Predicated region
      $region25: #{dcgan_discriminator_forward.1} parent=11 // pred_check
        %p239 = pneg %p126
      $region26: #{dcgan_discriminator_forward.1} parent=11 // pred_check_branch
        %241 = sbr.rel (%p239) target = $region28
      $region27: #{dcgan_discriminator_forward.1} parent=11 // pred_region
        _
      $region28: #{dcgan_discriminator_forward.1} parent=11 // pred_fallthru
        _
      // Predicated region
      $region29: #{dcgan_discriminator_forward.1} parent=11 // pred_check
        %p242 = pneg %p147
      $region30: #{dcgan_discriminator_forward.1} parent=11 // pred_check_branch
        %244 = sbr.rel (%p242) target = $region32
      $region31: #{dcgan_discriminator_forward.1} parent=11 // pred_region
        _
      $region32: #{dcgan_discriminator_forward.1} parent=11 // pred_fallthru
        _
      // Predicated region
      $region33: #{dcgan_discriminator_forward.1} parent=11 // pred_check
        %p245 = pneg %p168
      $region34: #{dcgan_discriminator_forward.1} parent=11 // pred_check_branch
        %247 = sbr.rel (%p245) target = $region36
      $region35: #{dcgan_discriminator_forward.1} parent=11 // pred_region
        _
      $region36: #{dcgan_discriminator_forward.1} parent=11 // pred_fallthru
        _
      // Predicated region
      $region37: #{dcgan_discriminator_forward.1} parent=11 // pred_check
        %p248 = pneg %p189
      $region38: #{dcgan_discriminator_forward.1} parent=11 // pred_check_branch
        %250 = sbr.rel (%p248) target = $region40
      $region39: #{dcgan_discriminator_forward.1} parent=11 // pred_region
        _
      $region40: #{dcgan_discriminator_forward.1} parent=11 // pred_fallthru
        _
    $region12: #{dcgan_discriminator_forward.1} parent=5 // pred_fallthru
      _
    %p251 = scmp.lt.s32.totalorder %s16, 2
    // Predicated region
    $region41: #{dcgan_discriminator_forward.1} parent=5 // pred_check
      %p252 = pneg %p251
    $region42: #{dcgan_discriminator_forward.1} parent=5 // pred_check_branch
      %254 = sbr.rel (%p252) target = $region44
    $region43: #{dcgan_discriminator_forward.1} parent=5 // pred_region
      // Predicated region
      $region45: #{dcgan_discriminator_forward.1} parent=43 // pred_check
        %p255 = pneg %p36
      $region46: #{dcgan_discriminator_forward.1} parent=43 // pred_check_branch
        %257 = sbr.rel (%p255) target = $region48
      $region47: #{dcgan_discriminator_forward.1} parent=43 // pred_region
        %p258 = scmp.lt.s32.totalorder %s16, 1
        %s259 = scalar_select %p258, %s16, 1
        %s260 = smul.addr %s259, 8
        %s261 = smul.addr %s260, 4
        %s262 = scalar_lea.vmem %s0, %s261
      $region48: #{dcgan_discriminator_forward.1} parent=43 // pred_fallthru
        _
    $region44: #{dcgan_discriminator_forward.1} parent=5 // pred_fallthru
      _
    %p263 = scmp.le.s32.totalorder 1, %s16
    %p264 = scmp.lt.s32.totalorder %s16, 3
    %p265 = pnand %p263, %p264
    %p266 = pneg %p265
    // Predicated region
    $region49: #{dcgan_discriminator_forward.1} parent=5 // pred_check
      _
    $region50: #{dcgan_discriminator_forward.1} parent=5 // pred_check_branch
      %268 = sbr.rel (%p265) target = $region52
    $region51: #{dcgan_discriminator_forward.1} parent=5 // pred_region
      %s269 = ssub.s32 %s16, 1
      %p270 = scmp.lt.s32.totalorder %s21, 1
      %s271 = scalar_select %p270, %s21, 1
      %s272 = smul.addr %s271, 8
      %s273 = smul.addr %s272, 4
      %s274 = scalar_lea.vmem %s0, %s273
      %p275 = pneg %p42
      %p276 = pneg %p39
      %p277 = pneg %p63
      %p278 = pneg %p60
      %p279 = pneg %p84
      %p280 = pneg %p81
      %p281 = pneg %p105
      %p282 = pneg %p102
      %p283 = pneg %p126
      %p284 = pneg %p123
      %p285 = pneg %p147
      %p286 = pneg %p144
      %p287 = pneg %p168
      %p288 = pneg %p165
      %p289 = pneg %p189
      %p290 = pneg %p186
      %p291 = pneg %p215
      %p292 = pneg %p212
      %p293 = scmp.lt.s32.totalorder %s21, 1
      %s294 = scalar_select %p293, %s21, 1
      %s295 = scalar_lea.vmem %s8, %s294
      %p296 = scmp.lt.s32.totalorder %s21, 1
      %s297 = scalar_select %p296, %s21, 1
      %s298 = smul.addr %s297, 8
      %s299 = smul.addr %s298, 4
      %s300 = scalar_lea.vmem %s0, %s299
      %p301 = scmp.lt.s32.totalorder %s21, 1
      %s302 = scalar_select %p301, %s21, 1
      %s303 = scalar_lea.vmem %s8, %s302
      %v305 = vld [vmem:[%s300] sm:$0xf]
      %v306 = vld [vmem:[%s300 + $0x4] sm:$0xf]
      %v307 = vld [vmem:[%s300 + $0x8] sm:$0xf]
      %v308 = vld [vmem:[%s300 + $0xc] sm:$0xf]
      %v309 = vld [vmem:[%s300 + $0x10] sm:$0xf]
      %v310 = vld [vmem:[%s300 + $0x14] sm:$0xf]
      %v311 = vld [vmem:[%s300 + $0x18] sm:$0xf]
      %v312 = vld [vmem:[%s300 + $0x1c] sm:$0xf]
      %v313 = vld [vmem:[%s1] sm:$0xf]
      %v314 = vld [vmem:[%s1 + $0x4] sm:$0xf]
      %v315 = vld [vmem:[%s1 + $0x8] sm:$0xf]
      %v316 = vld [vmem:[%s1 + $0xc] sm:$0xf]
      %v317 = vld [vmem:[%s1 + $0x10] sm:$0xf]
      %v318 = vld [vmem:[%s1 + $0x14] sm:$0xf]
      %v319 = vld [vmem:[%s1 + $0x18] sm:$0xf]
      %v320 = vld [vmem:[%s1 + $0x1c] sm:$0xf]
      %v321 = vld [vmem:[%s2] sm:$0x1]
      %v323 = vperm.slane %v321, 0
      %v333 = vunpack.c.l.b16 %v305
      %v334 = vunpack.c.l.b16 %v306
      %v335 = vunpack.c.l.b16 %v307
      %v336 = vunpack.c.l.b16 %v308
      %v337 = vunpack.c.l.b16 %v309
      %v338 = vunpack.c.l.b16 %v310
      %v339 = vunpack.c.l.b16 %v311
      %v340 = vunpack.c.l.b16 %v312
      %v341 = vpack.c.b16 %v334, %v333
      %v342 = vpack.c.b16 %v336, %v335
      %v343 = vpack.c.b16 %v338, %v337
      %v344 = vpack.c.b16 %v340, %v339
      %v353 = vunpack.c.l.b16 %v313
      %v354 = vunpack.c.l.b16 %v314
      %v355 = vunpack.c.l.b16 %v315
      %v356 = vunpack.c.l.b16 %v316
      %v357 = vunpack.c.l.b16 %v317
      %v358 = vunpack.c.l.b16 %v318
      %v359 = vunpack.c.l.b16 %v319
      %v360 = vunpack.c.l.b16 %v320
      %v361 = vpack.c.b16 %v354, %v353
      %v362 = vpack.c.b16 %v356, %v355
      %v363 = vpack.c.b16 %v358, %v357
      %v364 = vpack.c.b16 %v360, %v359
      %vm369 = vcmask 523264
      %v371 = vsel %vm369, %v341, 0
      %v374 = vsel %vm369, %v342, 0
      %v377 = vsel %vm369, %v343, 0
      %v380 = vsel %vm369, %v344, 0
      %382 = vmatpush.bf16.msra.mxu0 0
      %383 = vmatpush.bf16.msra.mxu0 0
      %384 = vmatpush.bf16.msra.mxu0 0
      %385 = vmatpush.bf16.msra.mxu0 0
      %386 = vmatpush.bf16.msra.mxu0 %v364
      %387 = vmatpush.bf16.msra.mxu0 %v363
      %388 = vmatpush.bf16.msra.mxu0 %v362
      %389 = vmatpush.bf16.msra.mxu0 %v361
      %390 = vmatmul.bf16.gmra.mxu0 %v371
      %v391 = vpop.f32.mrf.mxu0
      %v392 = vadd.f32 %v323, %v391
      %v393 = vpop.f32.mrf.mxu0
      %v394 = vadd.f32 %v323, %v393
      %395 = vmatmul.bf16.gmra.mxu0 %v374
      %v396 = vpop.f32.mrf.mxu0
      %v397 = vadd.f32 %v323, %v396
      %v398 = vpop.f32.mrf.mxu0
      %v399 = vadd.f32 %v323, %v398
      %400 = vmatmul.bf16.gmra.mxu0 %v377
      %v401 = vpop.f32.mrf.mxu0
      %v402 = vadd.f32 %v323, %v401
      %v403 = vpop.f32.mrf.mxu0
      %v404 = vadd.f32 %v323, %v403
      %405 = vmatmul.bf16.gmra.mxu0 %v380
      %v406 = vpop.f32.mrf.mxu0
      %v407 = vadd.f32 %v323, %v406
      %v408 = vpop.f32.mrf.mxu0
      %v409 = vadd.f32 %v323, %v408
      %410 = vdwg.mxu0
      %vm411 = vcmp.gt.f32.partialorder %v392, 0.0
      %vm412 = vcmp.gt.f32.partialorder %v394, 0.0
      %vm413 = vcmp.gt.f32.partialorder %v397, 0.0
      %vm414 = vcmp.gt.f32.partialorder %v399, 0.0
      %vm415 = vcmp.gt.f32.partialorder %v402, 0.0
      %vm416 = vcmp.gt.f32.partialorder %v404, 0.0
      %vm417 = vcmp.gt.f32.partialorder %v407, 0.0
      %vm418 = vcmp.gt.f32.partialorder %v409, 0.0
      %v419 = vmul.f32 %v392, 0.2
      %v420 = vmul.f32 %v394, 0.2
      %v421 = vmul.f32 %v397, 0.2
      %v422 = vmul.f32 %v399, 0.2
      %v423 = vmul.f32 %v402, 0.2
      %v424 = vmul.f32 %v404, 0.2
      %v425 = vmul.f32 %v407, 0.2
      %v426 = vmul.f32 %v409, 0.2
      %v427 = vsel %vm411, %v392, %v419
      %v428 = vsel %vm412, %v394, %v420
      %v429 = vsel %vm413, %v397, %v421
      %v430 = vsel %vm414, %v399, %v422
      %v431 = vsel %vm415, %v402, %v423
      %v432 = vsel %vm416, %v404, %v424
      %v433 = vsel %vm417, %v407, %v425
      %v434 = vsel %vm418, %v409, %v426
      %v435 = vpack.c.bf16 %v428, %v427
      %v436 = vpack.c.bf16 %v430, %v429
      %v437 = vpack.c.bf16 %v432, %v431
      %v438 = vpack.c.bf16 %v434, %v433
      %v439 = vld [vmem:[%s3] sm:$0xf]
      %v440 = vld [vmem:[%s3 + $0x4] sm:$0xf]
      %v441 = vld [vmem:[%s3 + $0x8] sm:$0xf]
      %v442 = vld [vmem:[%s3 + $0xc] sm:$0xf]
      %v443 = vld [vmem:[%s3 + $0x10] sm:$0xf]
      %v444 = vld [vmem:[%s3 + $0x14] sm:$0xf]
      %v445 = vld [vmem:[%s3 + $0x18] sm:$0xf]
      %v446 = vld [vmem:[%s3 + $0x1c] sm:$0xf]
      %v447 = vld [vmem:[%s3 + $0x20] sm:$0xf]
      %v448 = vld [vmem:[%s3 + $0x24] sm:$0xf]
      %v449 = vld [vmem:[%s3 + $0x28] sm:$0xf]
      %v450 = vld [vmem:[%s3 + $0x2c] sm:$0xf]
      %v451 = vld [vmem:[%s3 + $0x30] sm:$0xf]
      %v452 = vld [vmem:[%s3 + $0x34] sm:$0xf]
      %v453 = vld [vmem:[%s3 + $0x38] sm:$0xf]
      %v454 = vld [vmem:[%s3 + $0x3c] sm:$0xf]
      %v455 = vld [vmem:[%s3 + $0x40] sm:$0xf]
      %v456 = vld [vmem:[%s3 + $0x44] sm:$0xf]
      %v457 = vld [vmem:[%s3 + $0x48] sm:$0xf]
      %v458 = vld [vmem:[%s3 + $0x4c] sm:$0xf]
      %v459 = vld [vmem:[%s3 + $0x50] sm:$0xf]
      %v460 = vld [vmem:[%s3 + $0x54] sm:$0xf]
      %v461 = vld [vmem:[%s3 + $0x58] sm:$0xf]
      %v462 = vld [vmem:[%s3 + $0x5c] sm:$0xf]
      %v463 = vld [vmem:[%s3 + $0x60] sm:$0xf]
      %v464 = vld [vmem:[%s3 + $0x64] sm:$0xf]
      %v465 = vld [vmem:[%s3 + $0x68] sm:$0xf]
      %v466 = vld [vmem:[%s3 + $0x6c] sm:$0xf]
      %v467 = vld [vmem:[%s3 + $0x70] sm:$0xf]
      %v468 = vld [vmem:[%s3 + $0x74] sm:$0xf]
      %v469 = vld [vmem:[%s3 + $0x78] sm:$0xf]
      %v470 = vld [vmem:[%s3 + $0x7c] sm:$0xf]
      %v503 = vunpack.c.l.b16 %v439
      %v504 = vunpack.c.l.b16 %v440
      %v505 = vunpack.c.l.b16 %v441
      %v506 = vunpack.c.l.b16 %v442
      %v507 = vunpack.c.l.b16 %v443
      %v508 = vunpack.c.l.b16 %v444
      %v509 = vunpack.c.l.b16 %v445
      %v510 = vunpack.c.l.b16 %v446
      %v511 = vunpack.c.l.b16 %v447
      %v512 = vunpack.c.l.b16 %v448
      %v513 = vunpack.c.l.b16 %v449
      %v514 = vunpack.c.l.b16 %v450
      %v515 = vunpack.c.l.b16 %v451
      %v516 = vunpack.c.l.b16 %v452
      %v517 = vunpack.c.l.b16 %v453
      %v518 = vunpack.c.l.b16 %v454
      %v519 = vunpack.c.l.b16 %v455
      %v520 = vunpack.c.l.b16 %v456
      %v521 = vunpack.c.l.b16 %v457
      %v522 = vunpack.c.l.b16 %v458
      %v523 = vunpack.c.l.b16 %v459
      %v524 = vunpack.c.l.b16 %v460
      %v525 = vunpack.c.l.b16 %v461
      %v526 = vunpack.c.l.b16 %v462
      %v527 = vunpack.c.l.b16 %v463
      %v528 = vunpack.c.l.b16 %v464
      %v529 = vunpack.c.l.b16 %v465
      %v530 = vunpack.c.l.b16 %v466
      %v531 = vunpack.c.l.b16 %v467
      %v532 = vunpack.c.l.b16 %v468
      %v533 = vunpack.c.l.b16 %v469
      %v534 = vunpack.c.l.b16 %v470
      %v535 = vpack.c.b16 %v504, %v503
      %v536 = vpack.c.b16 %v506, %v505
      %v537 = vpack.c.b16 %v508, %v507
      %v538 = vpack.c.b16 %v510, %v509
      %v539 = vpack.c.b16 %v512, %v511
      %v540 = vpack.c.b16 %v514, %v513
      %v541 = vpack.c.b16 %v516, %v515
      %v542 = vpack.c.b16 %v518, %v517
      %v543 = vpack.c.b16 %v520, %v519
      %v544 = vpack.c.b16 %v522, %v521
      %v545 = vpack.c.b16 %v524, %v523
      %v546 = vpack.c.b16 %v526, %v525
      %v547 = vpack.c.b16 %v528, %v527
      %v548 = vpack.c.b16 %v530, %v529
      %v549 = vpack.c.b16 %v532, %v531
      %v550 = vpack.c.b16 %v534, %v533
      %v552 = vsel %vm369, %v535, 0
      %v555 = vsel %vm369, %v536, 0
      %v558 = vsel %vm369, %v537, 0
      %v561 = vsel %vm369, %v538, 0
      %v564 = vsel %vm369, %v539, 0
      %v567 = vsel %vm369, %v540, 0
      %v570 = vsel %vm369, %v541, 0
      %v573 = vsel %vm369, %v542, 0
      %v576 = vsel %vm369, %v543, 0
      %v579 = vsel %vm369, %v544, 0
      %v582 = vsel %vm369, %v545, 0
      %v585 = vsel %vm369, %v546, 0
      %v588 = vsel %vm369, %v547, 0
      %v591 = vsel %vm369, %v548, 0
      %v594 = vsel %vm369, %v549, 0
      %v597 = vsel %vm369, %v550, 0
      %599 = vmatpush.bf16.msra.mxu0 0
      %600 = vmatpush.bf16.msra.mxu0 0
      %601 = vmatpush.bf16.msra.mxu0 0
      %602 = vmatpush.bf16.msra.mxu0 0
      %603 = vmatpush.bf16.msra.mxu0 %v438
      %604 = vmatpush.bf16.msra.mxu0 %v437
      %605 = vmatpush.bf16.msra.mxu0 %v436
      %606 = vmatpush.bf16.msra.mxu0 %v435
      %607 = vmatmul.bf16.gmra.mxu0 %v552
      %v608 = vpop.f32.mrf.mxu0
      %v609 = vadd.f32 0.0, %v608
      %v610 = vpop.f32.mrf.mxu0
      %v611 = vadd.f32 0.0, %v610
      %612 = vmatmul.bf16.gmra.mxu0 %v555
      %v613 = vpop.f32.mrf.mxu0
      %v614 = vadd.f32 0.0, %v613
      %v615 = vpop.f32.mrf.mxu0
      %v616 = vadd.f32 0.0, %v615
      %617 = vmatmul.bf16.gmra.mxu0 %v558
      %v618 = vpop.f32.mrf.mxu0
      %v619 = vadd.f32 0.0, %v618
      %v620 = vpop.f32.mrf.mxu0
      %v621 = vadd.f32 0.0, %v620
      %622 = vmatmul.bf16.gmra.mxu0 %v561
      %v623 = vpop.f32.mrf.mxu0
      %v624 = vadd.f32 0.0, %v623
      %v625 = vpop.f32.mrf.mxu0
      %v626 = vadd.f32 0.0, %v625
      %627 = vmatmul.bf16.gmra.mxu0 %v564
      %v628 = vpop.f32.mrf.mxu0
      %v629 = vadd.f32 0.0, %v628
      %v630 = vpop.f32.mrf.mxu0
      %v631 = vadd.f32 0.0, %v630
      %632 = vmatmul.bf16.gmra.mxu0 %v567
      %v633 = vpop.f32.mrf.mxu0
      %v634 = vadd.f32 0.0, %v633
      %v635 = vpop.f32.mrf.mxu0
      %v636 = vadd.f32 0.0, %v635
      %637 = vmatmul.bf16.gmra.mxu0 %v570
      %v638 = vpop.f32.mrf.mxu0
      %v639 = vadd.f32 0.0, %v638
      %v640 = vpop.f32.mrf.mxu0
      %v641 = vadd.f32 0.0, %v640
      %642 = vmatmul.bf16.gmra.mxu0 %v573
      %v643 = vpop.f32.mrf.mxu0
      %v644 = vadd.f32 0.0, %v643
      %v645 = vpop.f32.mrf.mxu0
      %v646 = vadd.f32 0.0, %v645
      %647 = vmatmul.bf16.gmra.mxu0 %v576
      %v648 = vpop.f32.mrf.mxu0
      %v649 = vadd.f32 0.0, %v648
      %v650 = vpop.f32.mrf.mxu0
      %v651 = vadd.f32 0.0, %v650
      %652 = vmatmul.bf16.gmra.mxu0 %v579
      %v653 = vpop.f32.mrf.mxu0
      %v654 = vadd.f32 0.0, %v653
      %v655 = vpop.f32.mrf.mxu0
      %v656 = vadd.f32 0.0, %v655
      %657 = vmatmul.bf16.gmra.mxu0 %v582
      %v658 = vpop.f32.mrf.mxu0
      %v659 = vadd.f32 0.0, %v658
      %v660 = vpop.f32.mrf.mxu0
      %v661 = vadd.f32 0.0, %v660
      %662 = vmatmul.bf16.gmra.mxu0 %v585
      %v663 = vpop.f32.mrf.mxu0
      %v664 = vadd.f32 0.0, %v663
      %v665 = vpop.f32.mrf.mxu0
      %v666 = vadd.f32 0.0, %v665
      %667 = vmatmul.bf16.gmra.mxu0 %v588
      %v668 = vpop.f32.mrf.mxu0
      %v669 = vadd.f32 0.0, %v668
      %v670 = vpop.f32.mrf.mxu0
      %v671 = vadd.f32 0.0, %v670
      %672 = vmatmul.bf16.gmra.mxu0 %v591
      %v673 = vpop.f32.mrf.mxu0
      %v674 = vadd.f32 0.0, %v673
      %v675 = vpop.f32.mrf.mxu0
      %v676 = vadd.f32 0.0, %v675
      %677 = vmatmul.bf16.gmra.mxu0 %v594
      %v678 = vpop.f32.mrf.mxu0
      %v679 = vadd.f32 0.0, %v678
      %v680 = vpop.f32.mrf.mxu0
      %v681 = vadd.f32 0.0, %v680
      %682 = vmatmul.bf16.gmra.mxu0 %v597
      %v683 = vpop.f32.mrf.mxu0
      %v684 = vadd.f32 0.0, %v683
      %v685 = vpop.f32.mrf.mxu0
      %v686 = vadd.f32 0.0, %v685
      %687 = vdwg.mxu0
      %v688 = vld [vmem:[%s5] sm:$0x1]
      %v690 = vperm.slane %v688, 0
      %v692 = vadd.f32 %v690, 0.0
      %v693 = vpack.c.bf16 %v611, %v609
      %v694 = vld [vmem:[%s4] sm:$0xf]
      %vm695 = vcmask 64512
      %v697 = vsel %vm695, %v693, 0
      %vm699 = vcmask 1043456
      %v701 = vsel %vm699, %v694, 0
      %703 = vmatpush.bf16.msra.mxu0 0
      %704 = vmatpush.bf16.msra.mxu0 0
      %705 = vmatpush.bf16.msra.mxu0 0
      %706 = vmatpush.bf16.msra.mxu0 0
      %707 = vmatpush.bf16.msra.mxu0 0
      %708 = vmatpush.bf16.msra.mxu0 0
      %709 = vmatpush.bf16.msra.mxu0 0
      %710 = vmatpush.bf16.msra.mxu0 %v701
      %711 = vmatmul.bf16.gmra.mxu0 %v697
      %v712 = vpop.f32.mrf.mxu0
      %v713 = vadd.f32 0.0, %v712
      %v714 = vpop.f32.mrf.mxu0
      %v715 = vadd.f32 0.0, %v714
      %716 = vdwg.mxu0
      %v717 = vadd.f32 %v692, %v713
      %v718 = vadd.f32 %v692, %v715
      %v719 = vpack.c.bf16 %v616, %v614
      %s720 = scalar_lea.vmem %s4, 4
      %v721 = vld [vmem:[%s720] sm:$0xf]
      %v723 = vsel %vm695, %v719, 0
      %v726 = vsel %vm699, %v721, 0
      %728 = vmatpush.bf16.msra.mxu0 0
      %729 = vmatpush.bf16.msra.mxu0 0
      %730 = vmatpush.bf16.msra.mxu0 0
      %731 = vmatpush.bf16.msra.mxu0 0
      %732 = vmatpush.bf16.msra.mxu0 0
      %733 = vmatpush.bf16.msra.mxu0 0
      %734 = vmatpush.bf16.msra.mxu0 0
      %735 = vmatpush.bf16.msra.mxu0 %v726
      %736 = vmatmul.bf16.gmra.mxu0 %v723
      %v737 = vpop.f32.mrf.mxu0
      %v738 = vadd.f32 0.0, %v737
      %v739 = vpop.f32.mrf.mxu0
      %v740 = vadd.f32 0.0, %v739
      %741 = vdwg.mxu0
      %v742 = vadd.f32 %v717, %v738
      %v743 = vadd.f32 %v718, %v740
      %v744 = vpack.c.bf16 %v621, %v619
      %s745 = scalar_lea.vmem %s4, 8
      %v746 = vld [vmem:[%s745] sm:$0xf]
      %v748 = vsel %vm695, %v744, 0
      %v751 = vsel %vm699, %v746, 0
      %753 = vmatpush.bf16.msra.mxu0 0
      %754 = vmatpush.bf16.msra.mxu0 0
      %755 = vmatpush.bf16.msra.mxu0 0
      %756 = vmatpush.bf16.msra.mxu0 0
      %757 = vmatpush.bf16.msra.mxu0 0
      %758 = vmatpush.bf16.msra.mxu0 0
      %759 = vmatpush.bf16.msra.mxu0 0
      %760 = vmatpush.bf16.msra.mxu0 %v751
      %761 = vmatmul.bf16.gmra.mxu0 %v748
      %v762 = vpop.f32.mrf.mxu0
      %v763 = vadd.f32 0.0, %v762
      %v764 = vpop.f32.mrf.mxu0
      %v765 = vadd.f32 0.0, %v764
      %766 = vdwg.mxu0
      %v767 = vadd.f32 %v742, %v763
      %v768 = vadd.f32 %v743, %v765
      %v769 = vpack.c.bf16 %v626, %v624
      %s770 = scalar_lea.vmem %s4, 12
      %v771 = vld [vmem:[%s770] sm:$0xf]
      %v773 = vsel %vm695, %v769, 0
      %v776 = vsel %vm699, %v771, 0
      %778 = vmatpush.bf16.msra.mxu0 0
      %779 = vmatpush.bf16.msra.mxu0 0
      %780 = vmatpush.bf16.msra.mxu0 0
      %781 = vmatpush.bf16.msra.mxu0 0
      %782 = vmatpush.bf16.msra.mxu0 0
      %783 = vmatpush.bf16.msra.mxu0 0
      %784 = vmatpush.bf16.msra.mxu0 0
      %785 = vmatpush.bf16.msra.mxu0 %v776
      %786 = vmatmul.bf16.gmra.mxu0 %v773
      %v787 = vpop.f32.mrf.mxu0
      %v788 = vadd.f32 0.0, %v787
      %v789 = vpop.f32.mrf.mxu0
      %v790 = vadd.f32 0.0, %v789
      %791 = vdwg.mxu0
      %v792 = vadd.f32 %v767, %v788
      %v793 = vadd.f32 %v768, %v790
      %v794 = vpack.c.bf16 %v631, %v629
      %s795 = scalar_lea.vmem %s4, 16
      %v796 = vld [vmem:[%s795] sm:$0xf]
      %v798 = vsel %vm695, %v794, 0
      %v801 = vsel %vm699, %v796, 0
      %803 = vmatpush.bf16.msra.mxu0 0
      %804 = vmatpush.bf16.msra.mxu0 0
      %805 = vmatpush.bf16.msra.mxu0 0
      %806 = vmatpush.bf16.msra.mxu0 0
      %807 = vmatpush.bf16.msra.mxu0 0
      %808 = vmatpush.bf16.msra.mxu0 0
      %809 = vmatpush.bf16.msra.mxu0 0
      %810 = vmatpush.bf16.msra.mxu0 %v801
      %811 = vmatmul.bf16.gmra.mxu0 %v798
      %v812 = vpop.f32.mrf.mxu0
      %v813 = vadd.f32 0.0, %v812
      %v814 = vpop.f32.mrf.mxu0
      %v815 = vadd.f32 0.0, %v814
      %816 = vdwg.mxu0
      %v817 = vadd.f32 %v792, %v813
      %v818 = vadd.f32 %v793, %v815
      %v819 = vpack.c.bf16 %v636, %v634
      %s820 = scalar_lea.vmem %s4, 20
      %v821 = vld [vmem:[%s820] sm:$0xf]
      %v823 = vsel %vm695, %v819, 0
      %v826 = vsel %vm699, %v821, 0
      %828 = vmatpush.bf16.msra.mxu0 0
      %829 = vmatpush.bf16.msra.mxu0 0
      %830 = vmatpush.bf16.msra.mxu0 0
      %831 = vmatpush.bf16.msra.mxu0 0
      %832 = vmatpush.bf16.msra.mxu0 0
      %833 = vmatpush.bf16.msra.mxu0 0
      %834 = vmatpush.bf16.msra.mxu0 0
      %835 = vmatpush.bf16.msra.mxu0 %v826
      %836 = vmatmul.bf16.gmra.mxu0 %v823
      %v837 = vpop.f32.mrf.mxu0
      %v838 = vadd.f32 0.0, %v837
      %v839 = vpop.f32.mrf.mxu0
      %v840 = vadd.f32 0.0, %v839
      %841 = vdwg.mxu0
      %v842 = vadd.f32 %v817, %v838
      %v843 = vadd.f32 %v818, %v840
      %v844 = vpack.c.bf16 %v641, %v639
      %s845 = scalar_lea.vmem %s4, 24
      %v846 = vld [vmem:[%s845] sm:$0xf]
      %v848 = vsel %vm695, %v844, 0
      %v851 = vsel %vm699, %v846, 0
      %853 = vmatpush.bf16.msra.mxu0 0
      %854 = vmatpush.bf16.msra.mxu0 0
      %855 = vmatpush.bf16.msra.mxu0 0
      %856 = vmatpush.bf16.msra.mxu0 0
      %857 = vmatpush.bf16.msra.mxu0 0
      %858 = vmatpush.bf16.msra.mxu0 0
      %859 = vmatpush.bf16.msra.mxu0 0
      %860 = vmatpush.bf16.msra.mxu0 %v851
      %861 = vmatmul.bf16.gmra.mxu0 %v848
      %v862 = vpop.f32.mrf.mxu0
      %v863 = vadd.f32 0.0, %v862
      %v864 = vpop.f32.mrf.mxu0
      %v865 = vadd.f32 0.0, %v864
      %866 = vdwg.mxu0
      %v867 = vadd.f32 %v842, %v863
      %v868 = vadd.f32 %v843, %v865
      %v869 = vpack.c.bf16 %v646, %v644
      %s870 = scalar_lea.vmem %s4, 28
      %v871 = vld [vmem:[%s870] sm:$0xf]
      %v873 = vsel %vm695, %v869, 0
      %v876 = vsel %vm699, %v871, 0
      %878 = vmatpush.bf16.msra.mxu0 0
      %879 = vmatpush.bf16.msra.mxu0 0
      %880 = vmatpush.bf16.msra.mxu0 0
      %881 = vmatpush.bf16.msra.mxu0 0
      %882 = vmatpush.bf16.msra.mxu0 0
      %883 = vmatpush.bf16.msra.mxu0 0
      %884 = vmatpush.bf16.msra.mxu0 0
      %885 = vmatpush.bf16.msra.mxu0 %v876
      %886 = vmatmul.bf16.gmra.mxu0 %v873
      %v887 = vpop.f32.mrf.mxu0
      %v888 = vadd.f32 0.0, %v887
      %v889 = vpop.f32.mrf.mxu0
      %v890 = vadd.f32 0.0, %v889
      %891 = vdwg.mxu0
      %v892 = vadd.f32 %v867, %v888
      %v893 = vadd.f32 %v868, %v890
      %v894 = vpack.c.bf16 %v651, %v649
      %s895 = scalar_lea.vmem %s4, 32
      %v896 = vld [vmem:[%s895] sm:$0xf]
      %v898 = vsel %vm695, %v894, 0
      %v901 = vsel %vm699, %v896, 0
      %903 = vmatpush.bf16.msra.mxu0 0
      %904 = vmatpush.bf16.msra.mxu0 0
      %905 = vmatpush.bf16.msra.mxu0 0
      %906 = vmatpush.bf16.msra.mxu0 0
      %907 = vmatpush.bf16.msra.mxu0 0
      %908 = vmatpush.bf16.msra.mxu0 0
      %909 = vmatpush.bf16.msra.mxu0 0
      %910 = vmatpush.bf16.msra.mxu0 %v901
      %911 = vmatmul.bf16.gmra.mxu0 %v898
      %v912 = vpop.f32.mrf.mxu0
      %v913 = vadd.f32 0.0, %v912
      %v914 = vpop.f32.mrf.mxu0
      %v915 = vadd.f32 0.0, %v914
      %916 = vdwg.mxu0
      %v917 = vadd.f32 %v892, %v913
      %v918 = vadd.f32 %v893, %v915
      %v919 = vpack.c.bf16 %v656, %v654
      %s920 = scalar_lea.vmem %s4, 36
      %v921 = vld [vmem:[%s920] sm:$0xf]
      %v923 = vsel %vm695, %v919, 0
      %v926 = vsel %vm699, %v921, 0
      %928 = vmatpush.bf16.msra.mxu0 0
      %929 = vmatpush.bf16.msra.mxu0 0
      %930 = vmatpush.bf16.msra.mxu0 0
      %931 = vmatpush.bf16.msra.mxu0 0
      %932 = vmatpush.bf16.msra.mxu0 0
      %933 = vmatpush.bf16.msra.mxu0 0
      %934 = vmatpush.bf16.msra.mxu0 0
      %935 = vmatpush.bf16.msra.mxu0 %v926
      %936 = vmatmul.bf16.gmra.mxu0 %v923
      %v937 = vpop.f32.mrf.mxu0
      %v938 = vadd.f32 0.0, %v937
      %v939 = vpop.f32.mrf.mxu0
      %v940 = vadd.f32 0.0, %v939
      %941 = vdwg.mxu0
      %v942 = vadd.f32 %v917, %v938
      %v943 = vadd.f32 %v918, %v940
      %v944 = vpack.c.bf16 %v661, %v659
      %s945 = scalar_lea.vmem %s4, 40
      %v946 = vld [vmem:[%s945] sm:$0xf]
      %v948 = vsel %vm695, %v944, 0
      %v951 = vsel %vm699, %v946, 0
      %953 = vmatpush.bf16.msra.mxu0 0
      %954 = vmatpush.bf16.msra.mxu0 0
      %955 = vmatpush.bf16.msra.mxu0 0
      %956 = vmatpush.bf16.msra.mxu0 0
      %957 = vmatpush.bf16.msra.mxu0 0
      %958 = vmatpush.bf16.msra.mxu0 0
      %959 = vmatpush.bf16.msra.mxu0 0
      %960 = vmatpush.bf16.msra.mxu0 %v951
      %961 = vmatmul.bf16.gmra.mxu0 %v948
      %v962 = vpop.f32.mrf.mxu0
      %v963 = vadd.f32 0.0, %v962
      %v964 = vpop.f32.mrf.mxu0
      %v965 = vadd.f32 0.0, %v964
      %966 = vdwg.mxu0
      %v967 = vadd.f32 %v942, %v963
      %v968 = vadd.f32 %v943, %v965
      %v969 = vpack.c.bf16 %v666, %v664
      %s970 = scalar_lea.vmem %s4, 44
      %v971 = vld [vmem:[%s970] sm:$0xf]
      %v973 = vsel %vm695, %v969, 0
      %v976 = vsel %vm699, %v971, 0
      %978 = vmatpush.bf16.msra.mxu0 0
      %979 = vmatpush.bf16.msra.mxu0 0
      %980 = vmatpush.bf16.msra.mxu0 0
      %981 = vmatpush.bf16.msra.mxu0 0
      %982 = vmatpush.bf16.msra.mxu0 0
      %983 = vmatpush.bf16.msra.mxu0 0
      %984 = vmatpush.bf16.msra.mxu0 0
      %985 = vmatpush.bf16.msra.mxu0 %v976
      %986 = vmatmul.bf16.gmra.mxu0 %v973
      %v987 = vpop.f32.mrf.mxu0
      %v988 = vadd.f32 0.0, %v987
      %v989 = vpop.f32.mrf.mxu0
      %v990 = vadd.f32 0.0, %v989
      %991 = vdwg.mxu0
      %v992 = vadd.f32 %v967, %v988
      %v993 = vadd.f32 %v968, %v990
      %v994 = vpack.c.bf16 %v671, %v669
      %s995 = scalar_lea.vmem %s4, 48
      %v996 = vld [vmem:[%s995] sm:$0xf]
      %v998 = vsel %vm695, %v994, 0
      %v1001 = vsel %vm699, %v996, 0
      %1003 = vmatpush.bf16.msra.mxu0 0
      %1004 = vmatpush.bf16.msra.mxu0 0
      %1005 = vmatpush.bf16.msra.mxu0 0
      %1006 = vmatpush.bf16.msra.mxu0 0
      %1007 = vmatpush.bf16.msra.mxu0 0
      %1008 = vmatpush.bf16.msra.mxu0 0
      %1009 = vmatpush.bf16.msra.mxu0 0
      %1010 = vmatpush.bf16.msra.mxu0 %v1001
      %1011 = vmatmul.bf16.gmra.mxu0 %v998
      %v1012 = vpop.f32.mrf.mxu0
      %v1013 = vadd.f32 0.0, %v1012
      %v1014 = vpop.f32.mrf.mxu0
      %v1015 = vadd.f32 0.0, %v1014
      %1016 = vdwg.mxu0
      %v1017 = vadd.f32 %v992, %v1013
      %v1018 = vadd.f32 %v993, %v1015
      %v1019 = vpack.c.bf16 %v676, %v674
      %s1020 = scalar_lea.vmem %s4, 52
      %v1021 = vld [vmem:[%s1020] sm:$0xf]
      %v1023 = vsel %vm695, %v1019, 0
      %v1026 = vsel %vm699, %v1021, 0
      %1028 = vmatpush.bf16.msra.mxu0 0
      %1029 = vmatpush.bf16.msra.mxu0 0
      %1030 = vmatpush.bf16.msra.mxu0 0
      %1031 = vmatpush.bf16.msra.mxu0 0
      %1032 = vmatpush.bf16.msra.mxu0 0
      %1033 = vmatpush.bf16.msra.mxu0 0
      %1034 = vmatpush.bf16.msra.mxu0 0
      %1035 = vmatpush.bf16.msra.mxu0 %v1026
      %1036 = vmatmul.bf16.gmra.mxu0 %v1023
      %v1037 = vpop.f32.mrf.mxu0
      %v1038 = vadd.f32 0.0, %v1037
      %v1039 = vpop.f32.mrf.mxu0
      %v1040 = vadd.f32 0.0, %v1039
      %1041 = vdwg.mxu0
      %v1042 = vadd.f32 %v1017, %v1038
      %v1043 = vadd.f32 %v1018, %v1040
      %v1044 = vpack.c.bf16 %v681, %v679
      %s1045 = scalar_lea.vmem %s4, 56
      %v1046 = vld [vmem:[%s1045] sm:$0xf]
      %v1048 = vsel %vm695, %v1044, 0
      %v1051 = vsel %vm699, %v1046, 0
      %1053 = vmatpush.bf16.msra.mxu0 0
      %1054 = vmatpush.bf16.msra.mxu0 0
      %1055 = vmatpush.bf16.msra.mxu0 0
      %1056 = vmatpush.bf16.msra.mxu0 0
      %1057 = vmatpush.bf16.msra.mxu0 0
      %1058 = vmatpush.bf16.msra.mxu0 0
      %1059 = vmatpush.bf16.msra.mxu0 0
      %1060 = vmatpush.bf16.msra.mxu0 %v1051
      %1061 = vmatmul.bf16.gmra.mxu0 %v1048
      %v1062 = vpop.f32.mrf.mxu0
      %v1063 = vadd.f32 0.0, %v1062
      %v1064 = vpop.f32.mrf.mxu0
      %v1065 = vadd.f32 0.0, %v1064
      %1066 = vdwg.mxu0
      %v1067 = vadd.f32 %v1042, %v1063
      %v1068 = vadd.f32 %v1043, %v1065
      %v1069 = vpack.c.bf16 %v686, %v684
      %s1070 = scalar_lea.vmem %s4, 60
      %v1071 = vld [vmem:[%s1070] sm:$0xf]
      %v1073 = vsel %vm695, %v1069, 0
      %v1076 = vsel %vm699, %v1071, 0
      %1078 = vmatpush.bf16.msra.mxu0 0
      %1079 = vmatpush.bf16.msra.mxu0 0
      %1080 = vmatpush.bf16.msra.mxu0 0
      %1081 = vmatpush.bf16.msra.mxu0 0
      %1082 = vmatpush.bf16.msra.mxu0 0
      %1083 = vmatpush.bf16.msra.mxu0 0
      %1084 = vmatpush.bf16.msra.mxu0 0
      %1085 = vmatpush.bf16.msra.mxu0 %v1076
      %1086 = vmatmul.bf16.gmra.mxu0 %v1073
      %v1087 = vpop.f32.mrf.mxu0
      %v1088 = vadd.f32 0.0, %v1087
      %v1089 = vpop.f32.mrf.mxu0
      %v1090 = vadd.f32 0.0, %v1089
      %1091 = vdwg.mxu0
      %v1092 = vadd.f32 %v1067, %v1088
      %v1093 = vadd.f32 %v1068, %v1090
      %vm1094 = vcmp.gt.f32.partialorder %v1092, 0.0
      %vm1095 = vcmp.gt.f32.partialorder %v1093, 0.0
      %v1096 = vmul.f32 %v1092, 0.2
      %v1097 = vmul.f32 %v1093, 0.2
      %v1098 = vsel %vm1094, %v1092, %v1096
      %v1099 = vsel %vm1095, %v1093, %v1097
      %v1100 = vld [vmem:[%s6] sm:$0xff]
      %v1101 = vld [vmem:[%s6 + $0x8] sm:$0xff]
      %v1102 = vmul.f32 %v1098, %v1100
      %v1103 = vmul.f32 %v1099, %v1101
      %vm1104 = vcmask 130048
      %v1105 = vsel %vm1104, %v1102, 0.0
      %1106 = vadd.xlane.f32.xlu0 %v1105
      %v1107 = vpop.xlane.xlu0 %1106
      %v1108 = vsel %vm1104, %v1103, 0.0
      %1109 = vadd.xlane.f32.xlu0 %v1108
      %v1110 = vpop.xlane.xlu0 %1109
      %v1111 = vadd.f32 %v1107, %v1110
      %v1112 = vrot.slane %v1111, 4
      %v1113 = vadd.f32 %v1111, %v1112
      %v1114 = vrot.slane %v1113, 2
      %v1115 = vadd.f32 %v1113, %v1114
      %v1116 = vrot.slane %v1115, 1
      %v1117 = vadd.f32 %v1115, %v1116
      %v1118 = vld [vmem:[#allocation2] sm:$0x1]
      %v1119 = vadd.f32 %v1117, %v1118
      %v1120 = vxor.u32 %v1119, 2147483648
      %v1121 = vmul.f32 %v1120, 1.442695
      %v1122 = vpow.pop %v1121
      %v1123 = vadd.f32 %v1122, 1.0
      %v1124 = vrcp.pop %v1123
      %v1125 = vmul.f32 %v1123, %v1124
      %v1126 = vsub.f32 1.0, %v1125
      %v1127 = vmul.f32 %v1124, %v1126
      %v1128 = vadd.f32 %v1124, %v1127
      %vm1129 = vweird.f32 %v1123
      %vm1130 = vweird.f32 %v1124
      %vm1131 = vmor %vm1129, %vm1130
      %v1132 = vsel %vm1131, %v1124, %v1128
      %v1133 = vand.u32 2147483647, %v1123
      %vm1134 = vcmp.eq.f32.partialorder %v1133, 8.507059e+37
      %v1135 = vand.u32 %v1123, 2147483648
      %v1136 = vor.u32 1.1754944e-38, %v1135
      %v1137 = vsel %vm1134, %v1136, %v1132
      %v1138 = vmul.f32 1.0, %v1137
      %1140 = vset.pattern.permute.xlu0 0
      %1141 = vperm.xlu0 %1140, %v1138
      %v1142 = vpop.permute.xlu0 %1141
      %v1144 = vperm.slane %v1142, 0
      %1145 = vst [vmem:[%s303] sm:$0x1] %v1144
      %p1146 = scmp.lt.s32.totalorder %s21, 1
      %s1147 = scalar_select %p1146, %s21, 1
      %s1148 = scalar_lea.vmem %s8, %s1147
      // Predicated region
      $region53: #{dcgan_discriminator_forward.1} parent=51 // pred_check
        %p1149 = pneg %p212
      $region54: #{dcgan_discriminator_forward.1} parent=51 // pred_check_branch
        %1151 = sbr.rel (%p1149) target = $region56
      $region55: #{dcgan_discriminator_forward.1} parent=51 // pred_region
        _
      $region56: #{dcgan_discriminator_forward.1} parent=51 // pred_fallthru
        _
    $region52: #{dcgan_discriminator_forward.1} parent=5 // pred_fallthru
      _
    %p1152 = scmp.le.s32.totalorder 2, %s16
    // Predicated region
    $region57: #{dcgan_discriminator_forward.1} parent=5 // pred_check
      %p1153 = pneg %p1152
    $region58: #{dcgan_discriminator_forward.1} parent=5 // pred_check_branch
      %1155 = sbr.rel (%p1153) target = $region60
    $region59: #{dcgan_discriminator_forward.1} parent=5 // pred_region
      %s1156 = ssub.s32 %s16, 2
      // Predicated region
      $region61: #{dcgan_discriminator_forward.1} parent=59 // pred_check
        %p1157 = pneg %p218
      $region62: #{dcgan_discriminator_forward.1} parent=59 // pred_check_branch
        %1159 = sbr.rel (%p1157) target = $region64
      $region63: #{dcgan_discriminator_forward.1} parent=59 // pred_region
        %p1160 = scmp.lt.s32.totalorder %s22, 1
        %s1161 = scalar_select %p1160, %s22, 1
        %s1162 = scalar_lea.vmem %s8, %s1161
      $region64: #{dcgan_discriminator_forward.1} parent=59 // pred_fallthru
        _
    $region60: #{dcgan_discriminator_forward.1} parent=5 // pred_fallthru
      _
  $region6: #{dcgan_discriminator_forward.1} parent=0 // loop_footer
    %s20 = sadd.s32 1, %s16
  $region7: #{dcgan_discriminator_forward.1} parent=0 // loop_footer_branch
    %15 = sbr.rel target = $region3
  $region8: #{dcgan_discriminator_forward.1} parent=0 // loop_exit
    _

</llo_original>
